<compile_context>
chip_gen: v5e
topology: v5e:2x2
jax: 0.10.0
libtpu: 0.0.40
codegen_flags: <defaults>
</compile_context>

<pallas_src>
import math

import jax
import jax.numpy as jnp
import numpy as np
from jax.experimental import pallas as pl
from jax.experimental.pallas import tpu as pltpu

CLIP_DIM = 512  # openai/clip-vit-base-patch32 projection_dim
H1, H2, H3, H_OUT = 512, 128, 32, 1
DEFAULT_TILE_B = 1024   # good for v6e (128 MiB VMEM); also the v7x cap
MAX_TILE_B = 1024       # v7x has 64 MiB VMEM per TC -> keep tiles <= 1024
VMEM_LIMIT_BYTES = 32 * 1024 * 1024


def _cdiv(a, b):
    return (a + b - 1) // b


def _round_up(x, m):
    return ((x + m - 1) // m) * m


def _choose_tiling(batch, tile_b):
    """Pick (tb, padded_B): tb multiple of 16, <= MAX_TILE_B, minimal padding,
    and an even number of grid steps when multi-tile (v7x 2-TC sharding)."""
    tile_b = max(16, min(tile_b, MAX_TILE_B))
    n_tiles = max(_cdiv(batch, tile_b), 1)
    if n_tiles > 1 and n_tiles % 2 == 1:
        n_tiles += 1
    tb = _round_up(_cdiv(batch, n_tiles), 16)
    return tb, n_tiles * tb


def _validator_kernel(scale_ref,                       # SMEM (1,) f32
                      img_ref, txt_ref,                # VMEM (TB, D) bf16
                      w1s_ref,                         # (1, 512)   f32  (sim row)
                      w1i_ref, w1t_ref,                # (512, 512) bf16 (img/txt halves)
                      b1_ref,                          # (1, 512)   f32
                      w2_ref, b2_ref,                  # (512,128) bf16, (1,128) f32
                      w3_ref, b3_ref,                  # (128,32)  bf16, (1,32)  f32
                      w4_ref, b4_ref,                  # (1,32) f32, (1,1) f32
                      out_ref):                        # VMEM (TB, 1) f32
    # Upcast the bf16 embedding stream; keep all pre-MXU elementwise math in
    # f32 on the VPU/EUP (v5e has no bf16 vector path).
    img = img_ref[...].astype(jnp.float32)
    txt = txt_ref[...].astype(jnp.float32)

    # CLIP-style L2 normalization.
    img_n = img * jax.lax.rsqrt(jnp.sum(img * img, axis=-1, keepdims=True))
    txt_n = txt * jax.lax.rsqrt(jnp.sum(txt * txt, axis=-1, keepdims=True))

    # diag(logits_per_image) = logit_scale * row-wise dot(img_n, txt_n)
    sim = scale_ref[0] * jnp.sum(img_n * txt_n, axis=-1, keepdims=True)   # (TB, 1)

    # Linear 1 over the virtual concat [sim, img_n, txt_n]:
    # bias + sim column folded into the accumulator init, then two
    # accumulating K=512 bf16 MXU matmuls (no in-kernel concatenate, so no
    # (TB,1024) temp slab or extra cast/relayout pass).
    acc = sim * w1s_ref[...] + b1_ref[...]                                # (TB, 512)
    acc = acc + jnp.dot(img_n.astype(jnp.bfloat16), w1i_ref[...],
                        preferred_element_type=jnp.float32)
    acc = acc + jnp.dot(txt_n.astype(jnp.bfloat16), w1t_ref[...],
                        preferred_element_type=jnp.float32)
    h1 = jnp.maximum(acc, 0.0)

    h2 = jnp.maximum(
        jnp.dot(h1.astype(jnp.bfloat16), w2_ref[...],
                preferred_element_type=jnp.float32) + b2_ref[...], 0.0)
    h3 = jnp.maximum(
        jnp.dot(h2.astype(jnp.bfloat16), w3_ref[...],
                preferred_element_type=jnp.float32) + b3_ref[...], 0.0)

    # Tail (TB,32)@(32,1): degenerate on the MXU -> VPU multiply + lane reduce.
    out = jnp.sum(h3 * w4_ref[...], axis=-1, keepdims=True) + b4_ref[...]
    out_ref[...] = out.astype(out_ref.dtype)


def baseline_validator_forward(image_embeds, text_embeds, params,
                               tile_b=DEFAULT_TILE_B):
    """image_embeds / text_embeds: (B, CLIP_DIM) raw CLIP projection outputs."""
    B = image_embeds.shape[0]
    tb, b_pad = _choose_tiling(B, tile_b)

    # Halve the dominant HBM stream: embeddings travel as bf16 (the MXU already
    # sees bf16 activations; the f32 upcast for norm/sim happens in-kernel).
    image_embeds = image_embeds.astype(jnp.bfloat16)
    text_embeds = text_embeds.astype(jnp.bfloat16)
    if b_pad != B:
        pad = ((0, b_pad - B), (0, 0))
        # Pad with ones (not zeros) so rsqrt never sees a zero norm in pad rows.
        image_embeds = jnp.pad(image_embeds, pad, constant_values=1.0)
        text_embeds = jnp.pad(text_embeds, pad, constant_values=1.0)
    grid = (b_pad // tb,)

    emb_spec = pl.BlockSpec((tb, CLIP_DIM), lambda i: (i, 0))
    out_spec = pl.BlockSpec((tb, H_OUT), lambda i: (i, 0))
    smem_spec = pl.BlockSpec(memory_space=pltpu.MemorySpace.SMEM)

    def resident(x):
        # Block index never changes across the grid -> DMA'd once; single
        # buffer (no wasted second VMEM copy for a never-changing block).
        return pl.BlockSpec(x.shape, lambda i: (0,) * x.ndim,
                            pipeline_mode=pl.Buffered(1))

    weights = (params["w1_sim"], params["w1_img"], params["w1_txt"], params["b1"],
               params["w2"], params["b2"],
               params["w3"], params["b3"],
               params["w4"], params["b4"])

    weight_bytes = sum(int(np.prod(w.shape)) * w.dtype.itemsize for w in weights)
    flops = 2 * b_pad * (2 * CLIP_DIM * H1 + H1 * H2 + H2 * H3 + H3 * H_OUT) \
        + 10 * b_pad * CLIP_DIM                      # norms / sim / relus (approx.)
    bytes_accessed = weight_bytes + 2 * b_pad * CLIP_DIM * 2 + b_pad * 4
    cost = pl.CostEstimate(flops=flops, transcendentals=2 * b_pad,
                           bytes_accessed=bytes_accessed)

    out = pl.pallas_call(
        _validator_kernel,
        out_shape=jax.ShapeDtypeStruct((b_pad, H_OUT), jnp.float32),
        grid=grid,
        in_specs=[smem_spec, emb_spec, emb_spec] + [resident(w) for w in weights],
        out_specs=out_spec,
        compiler_params=pltpu.CompilerParams(
            dimension_semantics=("parallel",),
            vmem_limit_bytes=VMEM_LIMIT_BYTES),
        cost_estimate=cost,
    )(params["logit_scale"], image_embeds, text_embeds, *weights)
    return out[:B]


def init_params(key):
    """Deterministic synthetic parameters matching the module's shapes."""
    ks = jax.random.split(key, 4)

    def lin(k, fan_in, fan_out):
        bound = 1.0 / math.sqrt(fan_in)
        kw, kb = jax.random.split(k)
        w = jax.random.uniform(kw, (fan_in, fan_out), jnp.float32, -bound, bound)
        b = jax.random.uniform(kb, (1, fan_out), jnp.float32, -bound, bound)
        return w, b

    # Linear(2*clip_dim + 1, 512): split rows into [sim | img half | txt half].
    w1_full, b1 = lin(ks[0], 2 * CLIP_DIM + 1, H1)
    w1_sim = w1_full[:1, :]                                        # (1, 512)   f32
    w1_img = w1_full[1:1 + CLIP_DIM, :].astype(jnp.bfloat16)       # (512, 512) bf16
    w1_txt = w1_full[1 + CLIP_DIM:, :].astype(jnp.bfloat16)        # (512, 512) bf16
    w2, b2 = lin(ks[1], H1, H2)
    w2 = w2.astype(jnp.bfloat16)                                   # (512, 128) bf16
    w3, b3 = lin(ks[2], H2, H3)
    w3 = w3.astype(jnp.bfloat16)                                   # (128, 32)  bf16
    w4_col, b4 = lin(ks[3], H3, H_OUT)
    w4 = w4_col.T                                                  # (1, 32) row for VPU tail

    # CLIP logit_scale (exp of learned log-scale, init log(1/0.07)).
    logit_scale = jnp.array([math.exp(math.log(1.0 / 0.07))], dtype=jnp.float32)

    return dict(logit_scale=logit_scale,
                w1_sim=w1_sim, w1_img=w1_img, w1_txt=w1_txt, b1=b1,
                w2=w2, b2=b2, w3=w3, b3=b3, w4=w4, b4=b4)


def reference_forward(image_embeds, text_embeds, params):
    """Pure-JAX f32 reference (same stored weights, upcast to f32)."""
    img_n = image_embeds / jnp.linalg.norm(image_embeds, axis=-1, keepdims=True)
    txt_n = text_embeds / jnp.linalg.norm(text_embeds, axis=-1, keepdims=True)
    sim = params["logit_scale"][0] * jnp.sum(img_n * txt_n, axis=-1, keepdims=True)
    h1 = jnp.maximum(sim * params["w1_sim"]
                     + img_n @ params["w1_img"].astype(jnp.float32)
                     + txt_n @ params["w1_txt"].astype(jnp.float32)
                     + params["b1"], 0.0)
    h2 = jnp.maximum(h1 @ params["w2"].astype(jnp.float32) + params["b2"], 0.0)
    h3 = jnp.maximum(h2 @ params["w3"].astype(jnp.float32) + params["b3"], 0.0)
    return h3 @ params["w4"].T + params["b4"]


if __name__ == "__main__":
    key = jax.random.PRNGKey(0)
    k_img, k_txt, k_params = jax.random.split(key, 3)

    B = 2
    image_embeds = jax.random.normal(k_img, (B, CLIP_DIM), jnp.float32)
    text_embeds = jax.random.normal(k_txt, (B, CLIP_DIM), jnp.float32)
    params = init_params(k_params)

    out = baseline_validator_forward(image_embeds, text_embeds, params)
    out = jax.block_until_ready(out)

    # Reference sees the same bf16-quantized embeddings the kernel consumes, so
    # the remaining error is just the bf16 MXU operands (~1e-2 relative).
    img_q = image_embeds.astype(jnp.bfloat16).astype(jnp.float32)
    txt_q = text_embeds.astype(jnp.bfloat16).astype(jnp.float32)
    ref = reference_forward(img_q, txt_q, params)

    assert out.shape == (B, 1)
    np.testing.assert_allclose(np.asarray(out), np.asarray(ref), rtol=2e-2, atol=2e-2)

    print("KERNEL_OK")
</pallas_src>

<mosaic_0001>
module attributes {stable_mosaic.version = 11 : i64} {
  func.func @_validator_kernel(%arg0: i32, %arg1: memref<1xf32, #tpu.memory_space<smem>>, %arg2: memref<16x512xbf16, #tpu.memory_space<vmem>>, %arg3: memref<16x512xbf16, #tpu.memory_space<vmem>>, %arg4: memref<1x512xf32, #tpu.memory_space<vmem>>, %arg5: memref<512x512xbf16, #tpu.memory_space<vmem>>, %arg6: memref<512x512xbf16, #tpu.memory_space<vmem>>, %arg7: memref<1x512xf32, #tpu.memory_space<vmem>>, %arg8: memref<512x128xbf16, #tpu.memory_space<vmem>>, %arg9: memref<1x128xf32, #tpu.memory_space<vmem>>, %arg10: memref<128x32xbf16, #tpu.memory_space<vmem>>, %arg11: memref<1x32xf32, #tpu.memory_space<vmem>>, %arg12: memref<1x32xf32, #tpu.memory_space<vmem>>, %arg13: memref<1x1xf32, #tpu.memory_space<vmem>>, %arg14: memref<16x1xf32, #tpu.memory_space<vmem>>) attributes {dimension_semantics = [#tpu.dimension_semantics<parallel>], iteration_bounds = array<i64: 1>, scalar_prefetch = 0 : i64, scratch_operands = 0 : i64, tpu.core_type = #tpu.core_type<tc>, window_params = [{transform_indices = @transform_0, window_bounds = array<i64: 1>}, {transform_indices = @transform_1, window_bounds = array<i64: 16, 512>}, {transform_indices = @transform_2, window_bounds = array<i64: 16, 512>}, {pipeline_mode = #tpu.pipeline_mode<synchronous>, transform_indices = @transform_3, window_bounds = array<i64: 1, 512>}, {pipeline_mode = #tpu.pipeline_mode<synchronous>, transform_indices = @transform_4, window_bounds = array<i64: 512, 512>}, {pipeline_mode = #tpu.pipeline_mode<synchronous>, transform_indices = @transform_5, window_bounds = array<i64: 512, 512>}, {pipeline_mode = #tpu.pipeline_mode<synchronous>, transform_indices = @transform_6, window_bounds = array<i64: 1, 512>}, {pipeline_mode = #tpu.pipeline_mode<synchronous>, transform_indices = @transform_7, window_bounds = array<i64: 512, 128>}, {pipeline_mode = #tpu.pipeline_mode<synchronous>, transform_indices = @transform_8, window_bounds = array<i64: 1, 128>}, {pipeline_mode = #tpu.pipeline_mode<synchronous>, transform_indices = @transform_9, window_bounds = array<i64: 128, 32>}, {pipeline_mode = #tpu.pipeline_mode<synchronous>, transform_indices = @transform_10, window_bounds = array<i64: 1, 32>}, {pipeline_mode = #tpu.pipeline_mode<synchronous>, transform_indices = @transform_11, window_bounds = array<i64: 1, 32>}, {pipeline_mode = #tpu.pipeline_mode<synchronous>, transform_indices = @transform_12, window_bounds = array<i64: 1, 1>}, {transform_indices = @transform_13, window_bounds = array<i64: 16, 1>}]} {
    %c0 = arith.constant 0 : index
    %c0_0 = arith.constant 0 : index
    %0 = vector.load %arg2[%c0, %c0_0] : memref<16x512xbf16, #tpu.memory_space<vmem>>, vector<16x512xbf16>
    %1 = arith.extf %0 : vector<16x512xbf16> to vector<16x512xf32>
    %c0_1 = arith.constant 0 : index
    %c0_2 = arith.constant 0 : index
    %2 = vector.load %arg3[%c0_1, %c0_2] : memref<16x512xbf16, #tpu.memory_space<vmem>>, vector<16x512xbf16>
    %3 = arith.extf %2 : vector<16x512xbf16> to vector<16x512xf32>
    %4 = arith.mulf %1, %1 : vector<16x512xf32>
    %cst = arith.constant dense<0.000000e+00> : vector<16xf32>
    %5 = vector.multi_reduction <add>, %4, %cst [1] : vector<16x512xf32> to vector<16xf32>
    %6 = vector.shape_cast %5 : vector<16xf32> to vector<16x1xf32>
    %7 = math.rsqrt %6 : vector<16x1xf32>
    %8 = vector.broadcast %7 : vector<16x1xf32> to vector<16x512xf32>
    %9 = arith.mulf %1, %8 : vector<16x512xf32>
    %10 = arith.mulf %3, %3 : vector<16x512xf32>
    %cst_3 = arith.constant dense<0.000000e+00> : vector<16xf32>
    %11 = vector.multi_reduction <add>, %10, %cst_3 [1] : vector<16x512xf32> to vector<16xf32>
    %12 = vector.shape_cast %11 : vector<16xf32> to vector<16x1xf32>
    %13 = math.rsqrt %12 : vector<16x1xf32>
    %14 = vector.broadcast %13 : vector<16x1xf32> to vector<16x512xf32>
    %15 = arith.mulf %3, %14 : vector<16x512xf32>
    %c0_4 = arith.constant 0 : index
    %16 = memref.load %arg1[%c0_4] : memref<1xf32, #tpu.memory_space<smem>>
    %17 = arith.mulf %9, %15 : vector<16x512xf32>
    %cst_5 = arith.constant dense<0.000000e+00> : vector<16xf32>
    %18 = vector.multi_reduction <add>, %17, %cst_5 [1] : vector<16x512xf32> to vector<16xf32>
    %19 = vector.shape_cast %18 : vector<16xf32> to vector<16x1xf32>
    %20 = vector.broadcast %16 : f32 to vector<16x1xf32>
    %21 = arith.mulf %20, %19 : vector<16x1xf32>
    %c0_6 = arith.constant 0 : index
    %c0_7 = arith.constant 0 : index
    %22 = vector.load %arg4[%c0_6, %c0_7] : memref<1x512xf32, #tpu.memory_space<vmem>>, vector<1x512xf32>
    %23 = vector.broadcast %21 : vector<16x1xf32> to vector<16x512xf32>
    %24 = vector.broadcast %22 : vector<1x512xf32> to vector<16x512xf32>
    %25 = arith.mulf %23, %24 : vector<16x512xf32>
    %c0_8 = arith.constant 0 : index
    %c0_9 = arith.constant 0 : index
    %26 = vector.load %arg7[%c0_8, %c0_9] : memref<1x512xf32, #tpu.memory_space<vmem>>, vector<1x512xf32>
    %27 = vector.broadcast %26 : vector<1x512xf32> to vector<16x512xf32>
    %28 = arith.addf %25, %27 : vector<16x512xf32>
    %29 = arith.truncf %9 : vector<16x512xf32> to vector<16x512xbf16>
    %c0_10 = arith.constant 0 : index
    %c0_11 = arith.constant 0 : index
    %30 = vector.load %arg5[%c0_10, %c0_11] : memref<512x512xbf16, #tpu.memory_space<vmem>>, vector<512x512xbf16>
    %cst_12 = arith.constant dense<0.000000e+00> : vector<16x512xf32>
    %31 = tpu.matmul %29, %30, %cst_12 {dimension_numbers = #tpu.dot_dimension_numbers<[1], [0], [0], [1], [0, 0, 1, 1], [], []>} : vector<16x512xbf16>, vector<512x512xbf16>, vector<16x512xf32> -> vector<16x512xf32>
    %32 = arith.addf %28, %31 : vector<16x512xf32>
    %33 = arith.truncf %15 : vector<16x512xf32> to vector<16x512xbf16>
    %c0_13 = arith.constant 0 : index
    %c0_14 = arith.constant 0 : index
    %34 = vector.load %arg6[%c0_13, %c0_14] : memref<512x512xbf16, #tpu.memory_space<vmem>>, vector<512x512xbf16>
    %cst_15 = arith.constant dense<0.000000e+00> : vector<16x512xf32>
    %35 = tpu.matmul %33, %34, %cst_15 {dimension_numbers = #tpu.dot_dimension_numbers<[1], [0], [0], [1], [0, 0, 1, 1], [], []>} : vector<16x512xbf16>, vector<512x512xbf16>, vector<16x512xf32> -> vector<16x512xf32>
    %36 = arith.addf %32, %35 : vector<16x512xf32>
    %cst_16 = arith.constant 0.000000e+00 : f32
    %37 = vector.broadcast %cst_16 : f32 to vector<16x512xf32>
    %38 = arith.maximumf %36, %37 : vector<16x512xf32>
    %39 = arith.truncf %38 : vector<16x512xf32> to vector<16x512xbf16>
    %c0_17 = arith.constant 0 : index
    %c0_18 = arith.constant 0 : index
    %40 = vector.load %arg8[%c0_17, %c0_18] : memref<512x128xbf16, #tpu.memory_space<vmem>>, vector<512x128xbf16>
    %cst_19 = arith.constant dense<0.000000e+00> : vector<16x128xf32>
    %41 = tpu.matmul %39, %40, %cst_19 {dimension_numbers = #tpu.dot_dimension_numbers<[1], [0], [0], [1], [0, 0, 1, 1], [], []>} : vector<16x512xbf16>, vector<512x128xbf16>, vector<16x128xf32> -> vector<16x128xf32>
    %c0_20 = arith.constant 0 : index
    %c0_21 = arith.constant 0 : index
    %42 = vector.load %arg9[%c0_20, %c0_21] : memref<1x128xf32, #tpu.memory_space<vmem>>, vector<1x128xf32>
    %43 = vector.broadcast %42 : vector<1x128xf32> to vector<16x128xf32>
    %44 = arith.addf %41, %43 : vector<16x128xf32>
    %cst_22 = arith.constant 0.000000e+00 : f32
    %45 = vector.broadcast %cst_22 : f32 to vector<16x128xf32>
    %46 = arith.maximumf %44, %45 : vector<16x128xf32>
    %47 = arith.truncf %46 : vector<16x128xf32> to vector<16x128xbf16>
    %c0_23 = arith.constant 0 : index
    %c0_24 = arith.constant 0 : index
    %48 = vector.load %arg10[%c0_23, %c0_24] : memref<128x32xbf16, #tpu.memory_space<vmem>>, vector<128x32xbf16>
    %cst_25 = arith.constant dense<0.000000e+00> : vector<16x32xf32>
    %49 = tpu.matmul %47, %48, %cst_25 {dimension_numbers = #tpu.dot_dimension_numbers<[1], [0], [0], [1], [0, 0, 1, 1], [], []>} : vector<16x128xbf16>, vector<128x32xbf16>, vector<16x32xf32> -> vector<16x32xf32>
    %c0_26 = arith.constant 0 : index
    %c0_27 = arith.constant 0 : index
    %50 = vector.load %arg11[%c0_26, %c0_27] : memref<1x32xf32, #tpu.memory_space<vmem>>, vector<1x32xf32>
    %51 = vector.broadcast %50 : vector<1x32xf32> to vector<16x32xf32>
    %52 = arith.addf %49, %51 : vector<16x32xf32>
    %cst_28 = arith.constant 0.000000e+00 : f32
    %53 = vector.broadcast %cst_28 : f32 to vector<16x32xf32>
    %54 = arith.maximumf %52, %53 : vector<16x32xf32>
    %c0_29 = arith.constant 0 : index
    %c0_30 = arith.constant 0 : index
    %55 = vector.load %arg12[%c0_29, %c0_30] : memref<1x32xf32, #tpu.memory_space<vmem>>, vector<1x32xf32>
    %56 = vector.broadcast %55 : vector<1x32xf32> to vector<16x32xf32>
    %57 = arith.mulf %54, %56 : vector<16x32xf32>
    %cst_31 = arith.constant dense<0.000000e+00> : vector<16xf32>
    %58 = vector.multi_reduction <add>, %57, %cst_31 [1] : vector<16x32xf32> to vector<16xf32>
    %59 = vector.shape_cast %58 : vector<16xf32> to vector<16x1xf32>
    %c0_32 = arith.constant 0 : index
    %c0_33 = arith.constant 0 : index
    %60 = vector.load %arg13[%c0_32, %c0_33] : memref<1x1xf32, #tpu.memory_space<vmem>>, vector<1x1xf32>
    %61 = vector.broadcast %60 : vector<1x1xf32> to vector<16x1xf32>
    %62 = arith.addf %59, %61 : vector<16x1xf32>
    %c0_34 = arith.constant 0 : index
    %c0_35 = arith.constant 0 : index
    %63 = vector.load %arg14[%c0_34, %c0_35] : memref<16x1xf32, #tpu.memory_space<vmem>>, vector<16x1xf32>
    tpu.vector_store %arg14[%c0_34, %c0_35], %62 {strides = array<i32>} : memref<16x1xf32, #tpu.memory_space<vmem>>, vector<16x1xf32>,
    return
  }
  func.func @transform_0(%arg0: i32) -> i32 {
    %c0_i32 = arith.constant 0 : i32
    %c0_i32_0 = arith.constant 0 : i32
    return %c0_i32 : i32
  }
  func.func @transform_1(%arg0: i32) -> (i32, i32) {
    %c0_i32 = arith.constant 0 : i32
    %c0_i32_0 = arith.constant 0 : i32
    return %arg0, %c0_i32 : i32, i32
  }
  func.func @transform_2(%arg0: i32) -> (i32, i32) {
    %c0_i32 = arith.constant 0 : i32
    %c0_i32_0 = arith.constant 0 : i32
    return %arg0, %c0_i32 : i32, i32
  }
  func.func @transform_3(%arg0: i32) -> (i32, i32) {
    %c0_i32 = arith.constant 0 : i32
    %c0_i32_0 = arith.constant 0 : i32
    %c0_i32_1 = arith.constant 0 : i32
    return %c0_i32, %c0_i32_0 : i32, i32
  }
  func.func @transform_4(%arg0: i32) -> (i32, i32) {
    %c0_i32 = arith.constant 0 : i32
    %c0_i32_0 = arith.constant 0 : i32
    %c0_i32_1 = arith.constant 0 : i32
    return %c0_i32, %c0_i32_0 : i32, i32
  }
  func.func @transform_5(%arg0: i32) -> (i32, i32) {
    %c0_i32 = arith.constant 0 : i32
    %c0_i32_0 = arith.constant 0 : i32
    %c0_i32_1 = arith.constant 0 : i32
    return %c0_i32, %c0_i32_0 : i32, i32
  }
  func.func @transform_6(%arg0: i32) -> (i32, i32) {
    %c0_i32 = arith.constant 0 : i32
    %c0_i32_0 = arith.constant 0 : i32
    %c0_i32_1 = arith.constant 0 : i32
    return %c0_i32, %c0_i32_0 : i32, i32
  }
  func.func @transform_7(%arg0: i32) -> (i32, i32) {
    %c0_i32 = arith.constant 0 : i32
    %c0_i32_0 = arith.constant 0 : i32
    %c0_i32_1 = arith.constant 0 : i32
    return %c0_i32, %c0_i32_0 : i32, i32
  }
  func.func @transform_8(%arg0: i32) -> (i32, i32) {
    %c0_i32 = arith.constant 0 : i32
    %c0_i32_0 = arith.constant 0 : i32
    %c0_i32_1 = arith.constant 0 : i32
    return %c0_i32, %c0_i32_0 : i32, i32
  }
  func.func @transform_9(%arg0: i32) -> (i32, i32) {
    %c0_i32 = arith.constant 0 : i32
    %c0_i32_0 = arith.constant 0 : i32
    %c0_i32_1 = arith.constant 0 : i32
    return %c0_i32, %c0_i32_0 : i32, i32
  }
  func.func @transform_10(%arg0: i32) -> (i32, i32) {
    %c0_i32 = arith.constant 0 : i32
    %c0_i32_0 = arith.constant 0 : i32
    %c0_i32_1 = arith.constant 0 : i32
    return %c0_i32, %c0_i32_0 : i32, i32
  }
  func.func @transform_11(%arg0: i32) -> (i32, i32) {
    %c0_i32 = arith.constant 0 : i32
    %c0_i32_0 = arith.constant 0 : i32
    %c0_i32_1 = arith.constant 0 : i32
    return %c0_i32, %c0_i32_0 : i32, i32
  }
  func.func @transform_12(%arg0: i32) -> (i32, i32) {
    %c0_i32 = arith.constant 0 : i32
    %c0_i32_0 = arith.constant 0 : i32
    %c0_i32_1 = arith.constant 0 : i32
    return %c0_i32, %c0_i32_0 : i32, i32
  }
  func.func @transform_13(%arg0: i32) -> (i32, i32) {
    %c0_i32 = arith.constant 0 : i32
    %c0_i32_0 = arith.constant 0 : i32
    return %arg0, %c0_i32 : i32, i32
  }
}

</mosaic_0001>

<llo_original>
// kernel: tpu_custom_call.1
$region0: #{tpu_custom_call.1}
  #allocation0 [shape = 'u32[]', space=smem, size = 0x4, offset = 0x4, fixed_abs, tag = 'smem constant byte address 0x4 - core index']
  #allocation1 [shape = 'u32[72,128]{1,0:T(1,128)}', space=vmem, size = 0x9000, scoped, tag = 'internal scratch']
  #allocation2 [shape = 'f32[1]{0:T(128)S(6)}', space=smem, size = 0x200, scoped, tag = 'scoped memory for tpu_custom_call.1']
  #allocation3 [shape = 'f32[1,1]{1,0:T(1,128)S(1)}', space=vmem, size = 0x200, scoped, tag = 'scoped memory for tpu_custom_call.1']
  %s0 = inlined_call_operand.<no memory space> [shape: f32[1], index: 0, kind: input, shape index: {}]
  %s1 = inlined_call_operand.vmem [shape: bf16[16,512], index: 1, kind: input, shape index: {}]
  %s2 = inlined_call_operand.vmem [shape: bf16[16,512], index: 2, kind: input, shape index: {}]
  %s3 = inlined_call_operand.vmem [shape: f32[1,512], index: 3, kind: input, shape index: {}]
  %s4 = inlined_call_operand.hbm [shape: bf16[512,512], index: 4, kind: input, shape index: {}]
  %s5 = inlined_call_operand.hbm [shape: bf16[512,512], index: 5, kind: input, shape index: {}]
  %s6 = inlined_call_operand.vmem [shape: f32[1,512], index: 6, kind: input, shape index: {}]
  %s7 = inlined_call_operand.hbm [shape: bf16[512,128], index: 7, kind: input, shape index: {}]
  %s8 = inlined_call_operand.vmem [shape: f32[1,128], index: 8, kind: input, shape index: {}]
  %s9 = inlined_call_operand.vmem [shape: bf16[128,32], index: 9, kind: input, shape index: {}]
  %s10 = inlined_call_operand.vmem [shape: f32[1,32], index: 10, kind: input, shape index: {}]
  %s11 = inlined_call_operand.vmem [shape: f32[1,32], index: 11, kind: input, shape index: {}]
  %s12 = inlined_call_operand.<no memory space> [shape: f32[1,1], index: 12, kind: input, shape index: {}]
  %s13 = inlined_call_operand.vmem [shape: f32[16,1], index: 13, kind: output, shape index: {}]
  %s14 = sld [smem:[#allocation0]]
  $region74: #{tpu_custom_call.1} parent=0
    _
  %s16 = ssub.s32 1, %s14
  %s17 = scalar_select 0, %s16, %s14
  %18 = sst [smem:[#allocation2]] %s0
  %v19 = vstv %s12
  %20 = vst [vmem:[#allocation3] sm:$0x1] %v19
  $region1: #{tpu_custom_call.1} parent=0
    #allocation4 [shape = 'u8[524288]{0}', space=vmem, size = 0x80000, scoped, tag = 'input window, operand 4, single buffered']
    #allocation5 [shape = 's32[1]{0}', space=sflag, size = 0x4, scoped, tag = 'scoped memory for tpu_custom_call.1']
    #allocation6 [shape = 'u8[524288]{0}', space=vmem, size = 0x80000, scoped, tag = 'input window, operand 5, single buffered']
    #allocation7 [shape = 's32[1]{0}', space=sflag, size = 0x4, scoped, tag = 'scoped memory for tpu_custom_call.1']
    #allocation8 [shape = 'u8[131072]{0}', space=vmem, size = 0x20000, scoped, tag = 'input window, operand 7, single buffered']
    %21 = vsyncpa [#allocation5], 0
    %22 = vsyncpa [#allocation7], 0
    // Predicated region
    $region2: #{tpu_custom_call.1} parent=1 // pred_check
      _
    $region3: #{tpu_custom_call.1} parent=1 // pred_check_branch
      %24 = sbr.rel (0) target = $region5
    $region4: #{tpu_custom_call.1} parent=1 // pred_region
      _
    $region5: #{tpu_custom_call.1} parent=1 // pred_fallthru
      _
    // Predicated region
    $region6: #{tpu_custom_call.1} parent=1 // pred_check
      _
    $region7: #{tpu_custom_call.1} parent=1 // pred_check_branch
      %26 = sbr.rel (0) target = $region9
    $region8: #{tpu_custom_call.1} parent=1 // pred_region
      _
    $region9: #{tpu_custom_call.1} parent=1 // pred_fallthru
      _
    // Predicated region
    $region10: #{tpu_custom_call.1} parent=1 // pred_check
      _
    $region11: #{tpu_custom_call.1} parent=1 // pred_check_branch
      %28 = sbr.rel (0) target = $region13
    $region12: #{tpu_custom_call.1} parent=1 // pred_region
      _
    $region13: #{tpu_custom_call.1} parent=1 // pred_fallthru
      _
    // Predicated region
    $region14: #{tpu_custom_call.1} parent=1 // pred_check
      _
    $region15: #{tpu_custom_call.1} parent=1 // pred_check_branch
      %30 = sbr.rel (0) target = $region17
    $region16: #{tpu_custom_call.1} parent=1 // pred_region
      _
    $region17: #{tpu_custom_call.1} parent=1 // pred_fallthru
      _
    // Predicated region
    $region18: #{tpu_custom_call.1} parent=1 // pred_check
      _
    $region19: #{tpu_custom_call.1} parent=1 // pred_check_branch
      %32 = sbr.rel (0) target = $region21
    $region20: #{tpu_custom_call.1} parent=1 // pred_region
      %34 = vsyncadd [#allocation5], 0
      %s35 = sshll.u32 %s4, 4
      %s36 = int_to_ptr.hbm [resolvable:$true] %s35
      %s37 = sshll.u32 [#allocation4], 4
      %s38 = int_to_ptr.vmem [resolvable:$true] %s37
      %43 = dma.hbm_to_vmem [thread:$0]  %s36, 16384, %s38, [#allocation5], 256, 256, 16
    $region21: #{tpu_custom_call.1} parent=1 // pred_fallthru
      _
    // Predicated region
    $region22: #{tpu_custom_call.1} parent=1 // pred_check
      _
    $region23: #{tpu_custom_call.1} parent=1 // pred_check_branch
      %45 = sbr.rel (0) target = $region25
    $region24: #{tpu_custom_call.1} parent=1 // pred_region
      %47 = vsyncadd [#allocation7], 0
      %s48 = sshll.u32 %s5, 4
      %s49 = int_to_ptr.hbm [resolvable:$true] %s48
      %s50 = sshll.u32 [#allocation6], 4
      %s51 = int_to_ptr.vmem [resolvable:$true] %s50
      %56 = dma.hbm_to_vmem [thread:$0]  %s49, 16384, %s51, [#allocation7], 256, 256, 16
    $region25: #{tpu_custom_call.1} parent=1 // pred_fallthru
      _
    // Predicated region
    $region26: #{tpu_custom_call.1} parent=1 // pred_check
      _
    $region27: #{tpu_custom_call.1} parent=1 // pred_check_branch
      %58 = sbr.rel (0) target = $region29
    $region28: #{tpu_custom_call.1} parent=1 // pred_region
      _
    $region29: #{tpu_custom_call.1} parent=1 // pred_fallthru
      _
    // Predicated region
    $region30: #{tpu_custom_call.1} parent=1 // pred_check
      _
    $region31: #{tpu_custom_call.1} parent=1 // pred_check_branch
      %60 = sbr.rel (0) target = $region33
    $region32: #{tpu_custom_call.1} parent=1 // pred_region
      %62 = vsyncadd [#allocation7], 0
      %s63 = sshll.u32 %s7, 4
      %s64 = int_to_ptr.hbm [resolvable:$true] %s63
      %s65 = sshll.u32 [#allocation8], 4
      %s66 = int_to_ptr.vmem [resolvable:$true] %s65
      %71 = dma.hbm_to_vmem [thread:$0]  %s64, 4096, %s66, [#allocation7], 64, 64, 4
    $region33: #{tpu_custom_call.1} parent=1 // pred_fallthru
      _
    // Predicated region
    $region34: #{tpu_custom_call.1} parent=1 // pred_check
      _
    $region35: #{tpu_custom_call.1} parent=1 // pred_check_branch
      %73 = sbr.rel (0) target = $region37
    $region36: #{tpu_custom_call.1} parent=1 // pred_region
      _
    $region37: #{tpu_custom_call.1} parent=1 // pred_fallthru
      _
    // Predicated region
    $region38: #{tpu_custom_call.1} parent=1 // pred_check
      _
    $region39: #{tpu_custom_call.1} parent=1 // pred_check_branch
      %75 = sbr.rel (0) target = $region41
    $region40: #{tpu_custom_call.1} parent=1 // pred_region
      _
    $region41: #{tpu_custom_call.1} parent=1 // pred_fallthru
      _
    // Predicated region
    $region42: #{tpu_custom_call.1} parent=1 // pred_check
      _
    $region43: #{tpu_custom_call.1} parent=1 // pred_check_branch
      %77 = sbr.rel (0) target = $region45
    $region44: #{tpu_custom_call.1} parent=1 // pred_region
      _
    $region45: #{tpu_custom_call.1} parent=1 // pred_fallthru
      _
    // Predicated region
    $region46: #{tpu_custom_call.1} parent=1 // pred_check
      _
    $region47: #{tpu_custom_call.1} parent=1 // pred_check_branch
      %79 = sbr.rel (0) target = $region49
    $region48: #{tpu_custom_call.1} parent=1 // pred_region
      _
    $region49: #{tpu_custom_call.1} parent=1 // pred_fallthru
      _
    // Predicated region
    $region50: #{tpu_custom_call.1} parent=1 // pred_check
      _
    $region51: #{tpu_custom_call.1} parent=1 // pred_check_branch
      %81 = sbr.rel (0) target = $region53
    $region52: #{tpu_custom_call.1} parent=1 // pred_region
      _
    $region53: #{tpu_custom_call.1} parent=1 // pred_fallthru
      _
    // Predicated region
    $region54: #{tpu_custom_call.1} parent=1 // pred_check
      _
    $region55: #{tpu_custom_call.1} parent=1 // pred_check_branch
      %83 = sbr.rel (0) target = $region57
    $region56: #{tpu_custom_call.1} parent=1 // pred_region
      %85 = dma.done [#allocation5], 16384
    $region57: #{tpu_custom_call.1} parent=1 // pred_fallthru
      _
    // Predicated region
    $region58: #{tpu_custom_call.1} parent=1 // pred_check
      _
    $region59: #{tpu_custom_call.1} parent=1 // pred_check_branch
      %87 = sbr.rel (0) target = $region61
    $region60: #{tpu_custom_call.1} parent=1 // pred_region
      %89 = dma.done [#allocation7], 16384
    $region61: #{tpu_custom_call.1} parent=1 // pred_fallthru
      _
    // Predicated region
    $region62: #{tpu_custom_call.1} parent=1 // pred_check
      _
    $region63: #{tpu_custom_call.1} parent=1 // pred_check_branch
      %91 = sbr.rel (0) target = $region65
    $region64: #{tpu_custom_call.1} parent=1 // pred_region
      %93 = dma.done [#allocation7], 4096
    $region65: #{tpu_custom_call.1} parent=1 // pred_fallthru
      _
    %v94 = vld [vmem:[%s1] sm:$0xff]
    %v95 = vld [vmem:[%s1 + $0x8] sm:$0xff]
    %v96 = vld [vmem:[%s1 + $0x10] sm:$0xff]
    %v97 = vld [vmem:[%s1 + $0x18] sm:$0xff]
    %v98 = vunpack.c.l.bf16 %v94
    %v99 = vunpack.c.h.bf16 %v94
    %v100 = vunpack.c.l.bf16 %v95
    %v101 = vunpack.c.h.bf16 %v95
    %v102 = vunpack.c.l.bf16 %v96
    %v103 = vunpack.c.h.bf16 %v96
    %v104 = vunpack.c.l.bf16 %v97
    %v105 = vunpack.c.h.bf16 %v97
    %v106 = vld [vmem:[%s2] sm:$0xff]
    %v107 = vld [vmem:[%s2 + $0x8] sm:$0xff]
    %v108 = vld [vmem:[%s2 + $0x10] sm:$0xff]
    %v109 = vld [vmem:[%s2 + $0x18] sm:$0xff]
    %v110 = vunpack.c.l.bf16 %v106
    %v111 = vunpack.c.h.bf16 %v106
    %v112 = vunpack.c.l.bf16 %v107
    %v113 = vunpack.c.h.bf16 %v107
    %v114 = vunpack.c.l.bf16 %v108
    %v115 = vunpack.c.h.bf16 %v108
    %v116 = vunpack.c.l.bf16 %v109
    %v117 = vunpack.c.h.bf16 %v109
    %v118 = vmul.f32 %v98, %v98
    %v119 = vmul.f32 %v99, %v99
    %v120 = vmul.f32 %v100, %v100
    %v121 = vmul.f32 %v101, %v101
    %v122 = vmul.f32 %v102, %v102
    %v123 = vmul.f32 %v103, %v103
    %v124 = vmul.f32 %v104, %v104
    %v125 = vmul.f32 %v105, %v105
    %v126 = vadd.f32 %v118, %v119
    %v127 = vadd.f32 %v126, %v120
    %v128 = vadd.f32 %v127, %v121
    %129 = vadd.xlane.f32.xlu0 %v128
    %v130 = vpop.xlane.xlu0 %129
    %v131 = vadd.f32 %v122, %v123
    %v132 = vadd.f32 %v131, %v124
    %v133 = vadd.f32 %v132, %v125
    %134 = vadd.xlane.f32.xlu0 %v133
    %v135 = vpop.xlane.xlu0 %134
    %v136 = vrsqrt.pop %v130
    %v137 = vmul.f32 %v136, %v130
    %v138 = vmul.f32 %v137, %v136
    %v139 = vmul.f32 0.5, %v138
    %v140 = vsub.f32 1.5, %v139
    %v141 = vmul.f32 %v136, %v140
    %vm142 = vweird.f32 %v130
    %vm143 = vweird.f32 %v136
    %vm144 = vmor %vm142, %vm143
    %v145 = vsel %vm144, %v136, %v141
    %v146 = vrsqrt.pop %v135
    %v147 = vmul.f32 %v146, %v135
    %v148 = vmul.f32 %v147, %v146
    %v149 = vmul.f32 0.5, %v148
    %v150 = vsub.f32 1.5, %v149
    %v151 = vmul.f32 %v146, %v150
    %vm152 = vweird.f32 %v135
    %vm153 = vweird.f32 %v146
    %vm154 = vmor %vm152, %vm153
    %v155 = vsel %vm154, %v146, %v151
    %v156 = vmul.f32 %v98, %v145
    %v157 = vmul.f32 %v99, %v145
    %v158 = vmul.f32 %v100, %v145
    %v159 = vmul.f32 %v101, %v145
    %v160 = vmul.f32 %v102, %v155
    %v161 = vmul.f32 %v103, %v155
    %v162 = vmul.f32 %v104, %v155
    %v163 = vmul.f32 %v105, %v155
    %v164 = vmul.f32 %v110, %v110
    %v165 = vmul.f32 %v111, %v111
    %v166 = vmul.f32 %v112, %v112
    %v167 = vmul.f32 %v113, %v113
    %v168 = vmul.f32 %v114, %v114
    %v169 = vmul.f32 %v115, %v115
    %v170 = vmul.f32 %v116, %v116
    %v171 = vmul.f32 %v117, %v117
    %v172 = vadd.f32 %v164, %v165
    %v173 = vadd.f32 %v172, %v166
    %v174 = vadd.f32 %v173, %v167
    %175 = vadd.xlane.f32.xlu0 %v174
    %v176 = vpop.xlane.xlu0 %175
    %v177 = vadd.f32 %v168, %v169
    %v178 = vadd.f32 %v177, %v170
    %v179 = vadd.f32 %v178, %v171
    %180 = vadd.xlane.f32.xlu0 %v179
    %v181 = vpop.xlane.xlu0 %180
    %v182 = vrsqrt.pop %v176
    %v183 = vmul.f32 %v182, %v176
    %v184 = vmul.f32 %v183, %v182
    %v185 = vmul.f32 0.5, %v184
    %v186 = vsub.f32 1.5, %v185
    %v187 = vmul.f32 %v182, %v186
    %vm188 = vweird.f32 %v176
    %vm189 = vweird.f32 %v182
    %vm190 = vmor %vm188, %vm189
    %v191 = vsel %vm190, %v182, %v187
    %v192 = vrsqrt.pop %v181
    %v193 = vmul.f32 %v192, %v181
    %v194 = vmul.f32 %v193, %v192
    %v195 = vmul.f32 0.5, %v194
    %v196 = vsub.f32 1.5, %v195
    %v197 = vmul.f32 %v192, %v196
    %vm198 = vweird.f32 %v181
    %vm199 = vweird.f32 %v192
    %vm200 = vmor %vm198, %vm199
    %v201 = vsel %vm200, %v192, %v197
    %v202 = vmul.f32 %v110, %v191
    %v203 = vmul.f32 %v111, %v191
    %v204 = vmul.f32 %v112, %v191
    %v205 = vmul.f32 %v113, %v191
    %v206 = vmul.f32 %v114, %v201
    %v207 = vmul.f32 %v115, %v201
    %v208 = vmul.f32 %v116, %v201
    %v209 = vmul.f32 %v117, %v201
    %s210 = sld [smem:[#allocation2]]
    %v211 = vmul.f32 %v156, %v202
    %v212 = vmul.f32 %v157, %v203
    %v213 = vmul.f32 %v158, %v204
    %v214 = vmul.f32 %v159, %v205
    %v215 = vmul.f32 %v160, %v206
    %v216 = vmul.f32 %v161, %v207
    %v217 = vmul.f32 %v162, %v208
    %v218 = vmul.f32 %v163, %v209
    %v219 = vadd.f32 %v211, %v212
    %v220 = vadd.f32 %v219, %v213
    %v221 = vadd.f32 %v220, %v214
    %222 = vadd.xlane.f32.xlu0 %v221
    %v223 = vpop.xlane.xlu0 %222
    %v224 = vadd.f32 %v215, %v216
    %v225 = vadd.f32 %v224, %v217
    %v226 = vadd.f32 %v225, %v218
    %227 = vadd.xlane.f32.xlu0 %v226
    %v228 = vpop.xlane.xlu0 %227
    %v229 = vstv %s210
    %v230 = vmul.f32 %v229, %v223
    %v231 = vmul.f32 %v229, %v228
    %v232 = vld [vmem:[%s3] sm:$0xf]
    %v234 = vperm.slane %v232, 0
    %v235 = vperm.slane %v232, 1
    %v236 = vperm.slane %v232, 2
    %v237 = vperm.slane %v232, 3
    %v242 = vmul.f32 %v230, %v234
    %v243 = vmul.f32 %v230, %v235
    %v244 = vmul.f32 %v230, %v236
    %v245 = vmul.f32 %v230, %v237
    %v246 = vmul.f32 %v231, %v234
    %v247 = vmul.f32 %v231, %v235
    %v248 = vmul.f32 %v231, %v236
    %v249 = vmul.f32 %v231, %v237
    %v250 = vld [vmem:[%s6] sm:$0xf]
    %v252 = vperm.slane %v250, 0
    %v253 = vperm.slane %v250, 1
    %v254 = vperm.slane %v250, 2
    %v255 = vperm.slane %v250, 3
    %v260 = vadd.f32 %v242, %v252
    %v261 = vadd.f32 %v243, %v253
    %v262 = vadd.f32 %v244, %v254
    %v263 = vadd.f32 %v245, %v255
    %v264 = vadd.f32 %v246, %v252
    %v265 = vadd.f32 %v247, %v253
    %v266 = vadd.f32 %v248, %v254
    %v267 = vadd.f32 %v249, %v255
    %v268 = vpack.c.bf16 %v160, %v156
    %v269 = vpack.c.bf16 %v161, %v157
    %v270 = vpack.c.bf16 %v162, %v158
    %v271 = vpack.c.bf16 %v163, %v159
    %v272 = vld [vmem:[#allocation4] sm:$0xff]
    %v273 = vld [vmem:[#allocation4 + $0x8] sm:$0xff]
    %v274 = vld [vmem:[#allocation4 + $0x10] sm:$0xff]
    %v275 = vld [vmem:[#allocation4 + $0x18] sm:$0xff]
    %v276 = vld [vmem:[#allocation4 + $0x20] sm:$0xff]
    %v277 = vld [vmem:[#allocation4 + $0x28] sm:$0xff]
    %v278 = vld [vmem:[#allocation4 + $0x30] sm:$0xff]
    %v279 = vld [vmem:[#allocation4 + $0x38] sm:$0xff]
    %v280 = vld [vmem:[#allocation4 + $0x40] sm:$0xff]
    %v281 = vld [vmem:[#allocation4 + $0x48] sm:$0xff]
    %v282 = vld [vmem:[#allocation4 + $0x50] sm:$0xff]
    %v283 = vld [vmem:[#allocation4 + $0x58] sm:$0xff]
    %v284 = vld [vmem:[#allocation4 + $0x60] sm:$0xff]
    %v285 = vld [vmem:[#allocation4 + $0x68] sm:$0xff]
    %v286 = vld [vmem:[#allocation4 + $0x70] sm:$0xff]
    %v287 = vld [vmem:[#allocation4 + $0x78] sm:$0xff]
    %v288 = vld [vmem:[#allocation4 + $0x80] sm:$0xff]
    %v289 = vld [vmem:[#allocation4 + $0x88] sm:$0xff]
    %v290 = vld [vmem:[#allocation4 + $0x90] sm:$0xff]
    %v291 = vld [vmem:[#allocation4 + $0x98] sm:$0xff]
    %v292 = vld [vmem:[#allocation4 + $0xa0] sm:$0xff]
    %v293 = vld [vmem:[#allocation4 + $0xa8] sm:$0xff]
    %v294 = vld [vmem:[#allocation4 + $0xb0] sm:$0xff]
    %v295 = vld [vmem:[#allocation4 + $0xb8] sm:$0xff]
    %v296 = vld [vmem:[#allocation4 + $0xc0] sm:$0xff]
    %v297 = vld [vmem:[#allocation4 + $0xc8] sm:$0xff]
    %v298 = vld [vmem:[#allocation4 + $0xd0] sm:$0xff]
    %v299 = vld [vmem:[#allocation4 + $0xd8] sm:$0xff]
    %v300 = vld [vmem:[#allocation4 + $0xe0] sm:$0xff]
    %v301 = vld [vmem:[#allocation4 + $0xe8] sm:$0xff]
    %v302 = vld [vmem:[#allocation4 + $0xf0] sm:$0xff]
    %v303 = vld [vmem:[#allocation4 + $0xf8] sm:$0xff]
    %v304 = vld [vmem:[#allocation4 + $0x100] sm:$0xff]
    %v305 = vld [vmem:[#allocation4 + $0x108] sm:$0xff]
    %v306 = vld [vmem:[#allocation4 + $0x110] sm:$0xff]
    %v307 = vld [vmem:[#allocation4 + $0x118] sm:$0xff]
    %v308 = vld [vmem:[#allocation4 + $0x120] sm:$0xff]
    %v309 = vld [vmem:[#allocation4 + $0x128] sm:$0xff]
    %v310 = vld [vmem:[#allocation4 + $0x130] sm:$0xff]
    %v311 = vld [vmem:[#allocation4 + $0x138] sm:$0xff]
    %v312 = vld [vmem:[#allocation4 + $0x140] sm:$0xff]
    %v313 = vld [vmem:[#allocation4 + $0x148] sm:$0xff]
    %v314 = vld [vmem:[#allocation4 + $0x150] sm:$0xff]
    %v315 = vld [vmem:[#allocation4 + $0x158] sm:$0xff]
    %v316 = vld [vmem:[#allocation4 + $0x160] sm:$0xff]
    %v317 = vld [vmem:[#allocation4 + $0x168] sm:$0xff]
    %v318 = vld [vmem:[#allocation4 + $0x170] sm:$0xff]
    %v319 = vld [vmem:[#allocation4 + $0x178] sm:$0xff]
    %v320 = vld [vmem:[#allocation4 + $0x180] sm:$0xff]
    %v321 = vld [vmem:[#allocation4 + $0x188] sm:$0xff]
    %v322 = vld [vmem:[#allocation4 + $0x190] sm:$0xff]
    %v323 = vld [vmem:[#allocation4 + $0x198] sm:$0xff]
    %v324 = vld [vmem:[#allocation4 + $0x1a0] sm:$0xff]
    %v325 = vld [vmem:[#allocation4 + $0x1a8] sm:$0xff]
    %v326 = vld [vmem:[#allocation4 + $0x1b0] sm:$0xff]
    %v327 = vld [vmem:[#allocation4 + $0x1b8] sm:$0xff]
    %v328 = vld [vmem:[#allocation4 + $0x1c0] sm:$0xff]
    %v329 = vld [vmem:[#allocation4 + $0x1c8] sm:$0xff]
    %v330 = vld [vmem:[#allocation4 + $0x1d0] sm:$0xff]
    %v331 = vld [vmem:[#allocation4 + $0x1d8] sm:$0xff]
    %v332 = vld [vmem:[#allocation4 + $0x1e0] sm:$0xff]
    %v333 = vld [vmem:[#allocation4 + $0x1e8] sm:$0xff]
    %v334 = vld [vmem:[#allocation4 + $0x1f0] sm:$0xff]
    %v335 = vld [vmem:[#allocation4 + $0x1f8] sm:$0xff]
    %v336 = vld [vmem:[#allocation4 + $0x200] sm:$0xff]
    %v337 = vld [vmem:[#allocation4 + $0x208] sm:$0xff]
    %v338 = vld [vmem:[#allocation4 + $0x210] sm:$0xff]
    %v339 = vld [vmem:[#allocation4 + $0x218] sm:$0xff]
    %v340 = vld [vmem:[#allocation4 + $0x220] sm:$0xff]
    %v341 = vld [vmem:[#allocation4 + $0x228] sm:$0xff]
    %v342 = vld [vmem:[#allocation4 + $0x230] sm:$0xff]
    %v343 = vld [vmem:[#allocation4 + $0x238] sm:$0xff]
    %v344 = vld [vmem:[#allocation4 + $0x240] sm:$0xff]
    %v345 = vld [vmem:[#allocation4 + $0x248] sm:$0xff]
    %v346 = vld [vmem:[#allocation4 + $0x250] sm:$0xff]
    %v347 = vld [vmem:[#allocation4 + $0x258] sm:$0xff]
    %v348 = vld [vmem:[#allocation4 + $0x260] sm:$0xff]
    %v349 = vld [vmem:[#allocation4 + $0x268] sm:$0xff]
    %v350 = vld [vmem:[#allocation4 + $0x270] sm:$0xff]
    %v351 = vld [vmem:[#allocation4 + $0x278] sm:$0xff]
    %v352 = vld [vmem:[#allocation4 + $0x280] sm:$0xff]
    %v353 = vld [vmem:[#allocation4 + $0x288] sm:$0xff]
    %v354 = vld [vmem:[#allocation4 + $0x290] sm:$0xff]
    %v355 = vld [vmem:[#allocation4 + $0x298] sm:$0xff]
    %v356 = vld [vmem:[#allocation4 + $0x2a0] sm:$0xff]
    %v357 = vld [vmem:[#allocation4 + $0x2a8] sm:$0xff]
    %v358 = vld [vmem:[#allocation4 + $0x2b0] sm:$0xff]
    %v359 = vld [vmem:[#allocation4 + $0x2b8] sm:$0xff]
    %v360 = vld [vmem:[#allocation4 + $0x2c0] sm:$0xff]
    %v361 = vld [vmem:[#allocation4 + $0x2c8] sm:$0xff]
    %v362 = vld [vmem:[#allocation4 + $0x2d0] sm:$0xff]
    %v363 = vld [vmem:[#allocation4 + $0x2d8] sm:$0xff]
    %v364 = vld [vmem:[#allocation4 + $0x2e0] sm:$0xff]
    %v365 = vld [vmem:[#allocation4 + $0x2e8] sm:$0xff]
    %v366 = vld [vmem:[#allocation4 + $0x2f0] sm:$0xff]
    %v367 = vld [vmem:[#allocation4 + $0x2f8] sm:$0xff]
    %v368 = vld [vmem:[#allocation4 + $0x300] sm:$0xff]
    %v369 = vld [vmem:[#allocation4 + $0x308] sm:$0xff]
    %v370 = vld [vmem:[#allocation4 + $0x310] sm:$0xff]
    %v371 = vld [vmem:[#allocation4 + $0x318] sm:$0xff]
    %v372 = vld [vmem:[#allocation4 + $0x320] sm:$0xff]
    %v373 = vld [vmem:[#allocation4 + $0x328] sm:$0xff]
    %v374 = vld [vmem:[#allocation4 + $0x330] sm:$0xff]
    %v375 = vld [vmem:[#allocation4 + $0x338] sm:$0xff]
    %v376 = vld [vmem:[#allocation4 + $0x340] sm:$0xff]
    %v377 = vld [vmem:[#allocation4 + $0x348] sm:$0xff]
    %v378 = vld [vmem:[#allocation4 + $0x350] sm:$0xff]
    %v379 = vld [vmem:[#allocation4 + $0x358] sm:$0xff]
    %v380 = vld [vmem:[#allocation4 + $0x360] sm:$0xff]
    %v381 = vld [vmem:[#allocation4 + $0x368] sm:$0xff]
    %v382 = vld [vmem:[#allocation4 + $0x370] sm:$0xff]
    %v383 = vld [vmem:[#allocation4 + $0x378] sm:$0xff]
    %v384 = vld [vmem:[#allocation4 + $0x380] sm:$0xff]
    %v385 = vld [vmem:[#allocation4 + $0x388] sm:$0xff]
    %v386 = vld [vmem:[#allocation4 + $0x390] sm:$0xff]
    %v387 = vld [vmem:[#allocation4 + $0x398] sm:$0xff]
    %v388 = vld [vmem:[#allocation4 + $0x3a0] sm:$0xff]
    %v389 = vld [vmem:[#allocation4 + $0x3a8] sm:$0xff]
    %v390 = vld [vmem:[#allocation4 + $0x3b0] sm:$0xff]
    %v391 = vld [vmem:[#allocation4 + $0x3b8] sm:$0xff]
    %v392 = vld [vmem:[#allocation4 + $0x3c0] sm:$0xff]
    %v393 = vld [vmem:[#allocation4 + $0x3c8] sm:$0xff]
    %v394 = vld [vmem:[#allocation4 + $0x3d0] sm:$0xff]
    %v395 = vld [vmem:[#allocation4 + $0x3d8] sm:$0xff]
    %v396 = vld [vmem:[#allocation4 + $0x3e0] sm:$0xff]
    %v397 = vld [vmem:[#allocation4 + $0x3e8] sm:$0xff]
    %v398 = vld [vmem:[#allocation4 + $0x3f0] sm:$0xff]
    %v399 = vld [vmem:[#allocation4 + $0x3f8] sm:$0xff]
    %v528 = vunpack.c.l.b16 %v272
    %v529 = vunpack.c.h.b16 %v272
    %v530 = vunpack.c.l.b16 %v273
    %v531 = vunpack.c.h.b16 %v273
    %v532 = vunpack.c.l.b16 %v274
    %v533 = vunpack.c.h.b16 %v274
    %v534 = vunpack.c.l.b16 %v275
    %v535 = vunpack.c.h.b16 %v275
    %v536 = vunpack.c.l.b16 %v276
    %v537 = vunpack.c.h.b16 %v276
    %v538 = vunpack.c.l.b16 %v277
    %v539 = vunpack.c.h.b16 %v277
    %v540 = vunpack.c.l.b16 %v278
    %v541 = vunpack.c.h.b16 %v278
    %v542 = vunpack.c.l.b16 %v279
    %v543 = vunpack.c.h.b16 %v279
    %v544 = vunpack.c.l.b16 %v280
    %v545 = vunpack.c.h.b16 %v280
    %v546 = vunpack.c.l.b16 %v281
    %v547 = vunpack.c.h.b16 %v281
    %v548 = vunpack.c.l.b16 %v282
    %v549 = vunpack.c.h.b16 %v282
    %v550 = vunpack.c.l.b16 %v283
    %v551 = vunpack.c.h.b16 %v283
    %v552 = vunpack.c.l.b16 %v284
    %v553 = vunpack.c.h.b16 %v284
    %v554 = vunpack.c.l.b16 %v285
    %v555 = vunpack.c.h.b16 %v285
    %v556 = vunpack.c.l.b16 %v286
    %v557 = vunpack.c.h.b16 %v286
    %v558 = vunpack.c.l.b16 %v287
    %v559 = vunpack.c.h.b16 %v287
    %v560 = vunpack.c.l.b16 %v288
    %v561 = vunpack.c.h.b16 %v288
    %v562 = vunpack.c.l.b16 %v289
    %v563 = vunpack.c.h.b16 %v289
    %v564 = vunpack.c.l.b16 %v290
    %v565 = vunpack.c.h.b16 %v290
    %v566 = vunpack.c.l.b16 %v291
    %v567 = vunpack.c.h.b16 %v291
    %v568 = vunpack.c.l.b16 %v292
    %v569 = vunpack.c.h.b16 %v292
    %v570 = vunpack.c.l.b16 %v293
    %v571 = vunpack.c.h.b16 %v293
    %v572 = vunpack.c.l.b16 %v294
    %v573 = vunpack.c.h.b16 %v294
    %v574 = vunpack.c.l.b16 %v295
    %v575 = vunpack.c.h.b16 %v295
    %v576 = vunpack.c.l.b16 %v296
    %v577 = vunpack.c.h.b16 %v296
    %v578 = vunpack.c.l.b16 %v297
    %v579 = vunpack.c.h.b16 %v297
    %v580 = vunpack.c.l.b16 %v298
    %v581 = vunpack.c.h.b16 %v298
    %v582 = vunpack.c.l.b16 %v299
    %v583 = vunpack.c.h.b16 %v299
    %v584 = vunpack.c.l.b16 %v300
    %v585 = vunpack.c.h.b16 %v300
    %v586 = vunpack.c.l.b16 %v301
    %v587 = vunpack.c.h.b16 %v301
    %v588 = vunpack.c.l.b16 %v302
    %v589 = vunpack.c.h.b16 %v302
    %v590 = vunpack.c.l.b16 %v303
    %v591 = vunpack.c.h.b16 %v303
    %v592 = vunpack.c.l.b16 %v304
    %v593 = vunpack.c.h.b16 %v304
    %v594 = vunpack.c.l.b16 %v305
    %v595 = vunpack.c.h.b16 %v305
    %v596 = vunpack.c.l.b16 %v306
    %v597 = vunpack.c.h.b16 %v306
    %v598 = vunpack.c.l.b16 %v307
    %v599 = vunpack.c.h.b16 %v307
    %v600 = vunpack.c.l.b16 %v308
    %v601 = vunpack.c.h.b16 %v308
    %v602 = vunpack.c.l.b16 %v309
    %v603 = vunpack.c.h.b16 %v309
    %v604 = vunpack.c.l.b16 %v310
    %v605 = vunpack.c.h.b16 %v310
    %v606 = vunpack.c.l.b16 %v311
    %v607 = vunpack.c.h.b16 %v311
    %v608 = vunpack.c.l.b16 %v312
    %v609 = vunpack.c.h.b16 %v312
    %v610 = vunpack.c.l.b16 %v313
    %v611 = vunpack.c.h.b16 %v313
    %v612 = vunpack.c.l.b16 %v314
    %v613 = vunpack.c.h.b16 %v314
    %v614 = vunpack.c.l.b16 %v315
    %v615 = vunpack.c.h.b16 %v315
    %v616 = vunpack.c.l.b16 %v316
    %v617 = vunpack.c.h.b16 %v316
    %v618 = vunpack.c.l.b16 %v317
    %v619 = vunpack.c.h.b16 %v317
    %v620 = vunpack.c.l.b16 %v318
    %v621 = vunpack.c.h.b16 %v318
    %v622 = vunpack.c.l.b16 %v319
    %v623 = vunpack.c.h.b16 %v319
    %v624 = vunpack.c.l.b16 %v320
    %v625 = vunpack.c.h.b16 %v320
    %v626 = vunpack.c.l.b16 %v321
    %v627 = vunpack.c.h.b16 %v321
    %v628 = vunpack.c.l.b16 %v322
    %v629 = vunpack.c.h.b16 %v322
    %v630 = vunpack.c.l.b16 %v323
    %v631 = vunpack.c.h.b16 %v323
    %v632 = vunpack.c.l.b16 %v324
    %v633 = vunpack.c.h.b16 %v324
    %v634 = vunpack.c.l.b16 %v325
    %v635 = vunpack.c.h.b16 %v325
    %v636 = vunpack.c.l.b16 %v326
    %v637 = vunpack.c.h.b16 %v326
    %v638 = vunpack.c.l.b16 %v327
    %v639 = vunpack.c.h.b16 %v327
    %v640 = vunpack.c.l.b16 %v328
    %v641 = vunpack.c.h.b16 %v328
    %v642 = vunpack.c.l.b16 %v329
    %v643 = vunpack.c.h.b16 %v329
    %v644 = vunpack.c.l.b16 %v330
    %v645 = vunpack.c.h.b16 %v330
    %v646 = vunpack.c.l.b16 %v331
    %v647 = vunpack.c.h.b16 %v331
    %v648 = vunpack.c.l.b16 %v332
    %v649 = vunpack.c.h.b16 %v332
    %v650 = vunpack.c.l.b16 %v333
    %v651 = vunpack.c.h.b16 %v333
    %v652 = vunpack.c.l.b16 %v334
    %v653 = vunpack.c.h.b16 %v334
    %v654 = vunpack.c.l.b16 %v335
    %v655 = vunpack.c.h.b16 %v335
    %v656 = vunpack.c.l.b16 %v336
    %v657 = vunpack.c.h.b16 %v336
    %v658 = vunpack.c.l.b16 %v337
    %v659 = vunpack.c.h.b16 %v337
    %v660 = vunpack.c.l.b16 %v338
    %v661 = vunpack.c.h.b16 %v338
    %v662 = vunpack.c.l.b16 %v339
    %v663 = vunpack.c.h.b16 %v339
    %v664 = vunpack.c.l.b16 %v340
    %v665 = vunpack.c.h.b16 %v340
    %v666 = vunpack.c.l.b16 %v341
    %v667 = vunpack.c.h.b16 %v341
    %v668 = vunpack.c.l.b16 %v342
    %v669 = vunpack.c.h.b16 %v342
    %v670 = vunpack.c.l.b16 %v343
    %v671 = vunpack.c.h.b16 %v343
    %v672 = vunpack.c.l.b16 %v344
    %v673 = vunpack.c.h.b16 %v344
    %v674 = vunpack.c.l.b16 %v345
    %v675 = vunpack.c.h.b16 %v345
    %v676 = vunpack.c.l.b16 %v346
    %v677 = vunpack.c.h.b16 %v346
    %v678 = vunpack.c.l.b16 %v347
    %v679 = vunpack.c.h.b16 %v347
    %v680 = vunpack.c.l.b16 %v348
    %v681 = vunpack.c.h.b16 %v348
    %v682 = vunpack.c.l.b16 %v349
    %v683 = vunpack.c.h.b16 %v349
    %v684 = vunpack.c.l.b16 %v350
    %v685 = vunpack.c.h.b16 %v350
    %v686 = vunpack.c.l.b16 %v351
    %v687 = vunpack.c.h.b16 %v351
    %v688 = vunpack.c.l.b16 %v352
    %v689 = vunpack.c.h.b16 %v352
    %v690 = vunpack.c.l.b16 %v353
    %v691 = vunpack.c.h.b16 %v353
    %v692 = vunpack.c.l.b16 %v354
    %v693 = vunpack.c.h.b16 %v354
    %v694 = vunpack.c.l.b16 %v355
    %v695 = vunpack.c.h.b16 %v355
    %v696 = vunpack.c.l.b16 %v356
    %v697 = vunpack.c.h.b16 %v356
    %v698 = vunpack.c.l.b16 %v357
    %v699 = vunpack.c.h.b16 %v357
    %v700 = vunpack.c.l.b16 %v358
    %v701 = vunpack.c.h.b16 %v358
    %v702 = vunpack.c.l.b16 %v359
    %v703 = vunpack.c.h.b16 %v359
    %v704 = vunpack.c.l.b16 %v360
    %v705 = vunpack.c.h.b16 %v360
    %v706 = vunpack.c.l.b16 %v361
    %v707 = vunpack.c.h.b16 %v361
    %v708 = vunpack.c.l.b16 %v362
    %v709 = vunpack.c.h.b16 %v362
    %v710 = vunpack.c.l.b16 %v363
    %v711 = vunpack.c.h.b16 %v363
    %v712 = vunpack.c.l.b16 %v364
    %v713 = vunpack.c.h.b16 %v364
    %v714 = vunpack.c.l.b16 %v365
    %v715 = vunpack.c.h.b16 %v365
    %v716 = vunpack.c.l.b16 %v366
    %v717 = vunpack.c.h.b16 %v366
    %v718 = vunpack.c.l.b16 %v367
    %v719 = vunpack.c.h.b16 %v367
    %v720 = vunpack.c.l.b16 %v368
    %v721 = vunpack.c.h.b16 %v368
    %v722 = vunpack.c.l.b16 %v369
    %v723 = vunpack.c.h.b16 %v369
    %v724 = vunpack.c.l.b16 %v370
    %v725 = vunpack.c.h.b16 %v370
    %v726 = vunpack.c.l.b16 %v371
    %v727 = vunpack.c.h.b16 %v371
    %v728 = vunpack.c.l.b16 %v372
    %v729 = vunpack.c.h.b16 %v372
    %v730 = vunpack.c.l.b16 %v373
    %v731 = vunpack.c.h.b16 %v373
    %v732 = vunpack.c.l.b16 %v374
    %v733 = vunpack.c.h.b16 %v374
    %v734 = vunpack.c.l.b16 %v375
    %v735 = vunpack.c.h.b16 %v375
    %v736 = vunpack.c.l.b16 %v376
    %v737 = vunpack.c.h.b16 %v376
    %v738 = vunpack.c.l.b16 %v377
    %v739 = vunpack.c.h.b16 %v377
    %v740 = vunpack.c.l.b16 %v378
    %v741 = vunpack.c.h.b16 %v378
    %v742 = vunpack.c.l.b16 %v379
    %v743 = vunpack.c.h.b16 %v379
    %v744 = vunpack.c.l.b16 %v380
    %v745 = vunpack.c.h.b16 %v380
    %v746 = vunpack.c.l.b16 %v381
    %v747 = vunpack.c.h.b16 %v381
    %v748 = vunpack.c.l.b16 %v382
    %v749 = vunpack.c.h.b16 %v382
    %v750 = vunpack.c.l.b16 %v383
    %v751 = vunpack.c.h.b16 %v383
    %v752 = vunpack.c.l.b16 %v384
    %v753 = vunpack.c.h.b16 %v384
    %v754 = vunpack.c.l.b16 %v385
    %v755 = vunpack.c.h.b16 %v385
    %v756 = vunpack.c.l.b16 %v386
    %v757 = vunpack.c.h.b16 %v386
    %v758 = vunpack.c.l.b16 %v387
    %v759 = vunpack.c.h.b16 %v387
    %v760 = vunpack.c.l.b16 %v388
    %v761 = vunpack.c.h.b16 %v388
    %v762 = vunpack.c.l.b16 %v389
    %v763 = vunpack.c.h.b16 %v389
    %v764 = vunpack.c.l.b16 %v390
    %v765 = vunpack.c.h.b16 %v390
    %v766 = vunpack.c.l.b16 %v391
    %v767 = vunpack.c.h.b16 %v391
    %v768 = vunpack.c.l.b16 %v392
    %v769 = vunpack.c.h.b16 %v392
    %v770 = vunpack.c.l.b16 %v393
    %v771 = vunpack.c.h.b16 %v393
    %v772 = vunpack.c.l.b16 %v394
    %v773 = vunpack.c.h.b16 %v394
    %v774 = vunpack.c.l.b16 %v395
    %v775 = vunpack.c.h.b16 %v395
    %v776 = vunpack.c.l.b16 %v396
    %v777 = vunpack.c.h.b16 %v396
    %v778 = vunpack.c.l.b16 %v397
    %v779 = vunpack.c.h.b16 %v397
    %v780 = vunpack.c.l.b16 %v398
    %v781 = vunpack.c.h.b16 %v398
    %v782 = vunpack.c.l.b16 %v399
    %v783 = vunpack.c.h.b16 %v399
    %v784 = vpack.c.b16 %v532, %v528
    %v785 = vpack.c.b16 %v533, %v529
    %v786 = vpack.c.b16 %v534, %v530
    %v787 = vpack.c.b16 %v535, %v531
    %v788 = vpack.c.b16 %v540, %v536
    %v789 = vpack.c.b16 %v541, %v537
    %v790 = vpack.c.b16 %v542, %v538
    %v791 = vpack.c.b16 %v543, %v539
    %v792 = vpack.c.b16 %v548, %v544
    %v793 = vpack.c.b16 %v549, %v545
    %v794 = vpack.c.b16 %v550, %v546
    %v795 = vpack.c.b16 %v551, %v547
    %v796 = vpack.c.b16 %v556, %v552
    %v797 = vpack.c.b16 %v557, %v553
    %v798 = vpack.c.b16 %v558, %v554
    %v799 = vpack.c.b16 %v559, %v555
    %v800 = vpack.c.b16 %v564, %v560
    %v801 = vpack.c.b16 %v565, %v561
    %v802 = vpack.c.b16 %v566, %v562
    %v803 = vpack.c.b16 %v567, %v563
    %v804 = vpack.c.b16 %v572, %v568
    %v805 = vpack.c.b16 %v573, %v569
    %v806 = vpack.c.b16 %v574, %v570
    %v807 = vpack.c.b16 %v575, %v571
    %v808 = vpack.c.b16 %v580, %v576
    %v809 = vpack.c.b16 %v581, %v577
    %v810 = vpack.c.b16 %v582, %v578
    %v811 = vpack.c.b16 %v583, %v579
    %v812 = vpack.c.b16 %v588, %v584
    %v813 = vpack.c.b16 %v589, %v585
    %v814 = vpack.c.b16 %v590, %v586
    %v815 = vpack.c.b16 %v591, %v587
    %v816 = vpack.c.b16 %v596, %v592
    %v817 = vpack.c.b16 %v597, %v593
    %v818 = vpack.c.b16 %v598, %v594
    %v819 = vpack.c.b16 %v599, %v595
    %v820 = vpack.c.b16 %v604, %v600
    %v821 = vpack.c.b16 %v605, %v601
    %v822 = vpack.c.b16 %v606, %v602
    %v823 = vpack.c.b16 %v607, %v603
    %v824 = vpack.c.b16 %v612, %v608
    %v825 = vpack.c.b16 %v613, %v609
    %v826 = vpack.c.b16 %v614, %v610
    %v827 = vpack.c.b16 %v615, %v611
    %v828 = vpack.c.b16 %v620, %v616
    %v829 = vpack.c.b16 %v621, %v617
    %v830 = vpack.c.b16 %v622, %v618
    %v831 = vpack.c.b16 %v623, %v619
    %v832 = vpack.c.b16 %v628, %v624
    %v833 = vpack.c.b16 %v629, %v625
    %v834 = vpack.c.b16 %v630, %v626
    %v835 = vpack.c.b16 %v631, %v627
    %v836 = vpack.c.b16 %v636, %v632
    %v837 = vpack.c.b16 %v637, %v633
    %v838 = vpack.c.b16 %v638, %v634
    %v839 = vpack.c.b16 %v639, %v635
    %v840 = vpack.c.b16 %v644, %v640
    %v841 = vpack.c.b16 %v645, %v641
    %v842 = vpack.c.b16 %v646, %v642
    %v843 = vpack.c.b16 %v647, %v643
    %v844 = vpack.c.b16 %v652, %v648
    %v845 = vpack.c.b16 %v653, %v649
    %v846 = vpack.c.b16 %v654, %v650
    %v847 = vpack.c.b16 %v655, %v651
    %v848 = vpack.c.b16 %v660, %v656
    %v849 = vpack.c.b16 %v661, %v657
    %v850 = vpack.c.b16 %v662, %v658
    %v851 = vpack.c.b16 %v663, %v659
    %v852 = vpack.c.b16 %v668, %v664
    %v853 = vpack.c.b16 %v669, %v665
    %v854 = vpack.c.b16 %v670, %v666
    %v855 = vpack.c.b16 %v671, %v667
    %v856 = vpack.c.b16 %v676, %v672
    %v857 = vpack.c.b16 %v677, %v673
    %v858 = vpack.c.b16 %v678, %v674
    %v859 = vpack.c.b16 %v679, %v675
    %v860 = vpack.c.b16 %v684, %v680
    %v861 = vpack.c.b16 %v685, %v681
    %v862 = vpack.c.b16 %v686, %v682
    %v863 = vpack.c.b16 %v687, %v683
    %v864 = vpack.c.b16 %v692, %v688
    %v865 = vpack.c.b16 %v693, %v689
    %v866 = vpack.c.b16 %v694, %v690
    %v867 = vpack.c.b16 %v695, %v691
    %v868 = vpack.c.b16 %v700, %v696
    %v869 = vpack.c.b16 %v701, %v697
    %v870 = vpack.c.b16 %v702, %v698
    %v871 = vpack.c.b16 %v703, %v699
    %v872 = vpack.c.b16 %v708, %v704
    %v873 = vpack.c.b16 %v709, %v705
    %v874 = vpack.c.b16 %v710, %v706
    %v875 = vpack.c.b16 %v711, %v707
    %v876 = vpack.c.b16 %v716, %v712
    %v877 = vpack.c.b16 %v717, %v713
    %v878 = vpack.c.b16 %v718, %v714
    %v879 = vpack.c.b16 %v719, %v715
    %v880 = vpack.c.b16 %v724, %v720
    %v881 = vpack.c.b16 %v725, %v721
    %v882 = vpack.c.b16 %v726, %v722
    %v883 = vpack.c.b16 %v727, %v723
    %v884 = vpack.c.b16 %v732, %v728
    %v885 = vpack.c.b16 %v733, %v729
    %v886 = vpack.c.b16 %v734, %v730
    %v887 = vpack.c.b16 %v735, %v731
    %v888 = vpack.c.b16 %v740, %v736
    %v889 = vpack.c.b16 %v741, %v737
    %v890 = vpack.c.b16 %v742, %v738
    %v891 = vpack.c.b16 %v743, %v739
    %v892 = vpack.c.b16 %v748, %v744
    %v893 = vpack.c.b16 %v749, %v745
    %v894 = vpack.c.b16 %v750, %v746
    %v895 = vpack.c.b16 %v751, %v747
    %v896 = vpack.c.b16 %v756, %v752
    %v897 = vpack.c.b16 %v757, %v753
    %v898 = vpack.c.b16 %v758, %v754
    %v899 = vpack.c.b16 %v759, %v755
    %v900 = vpack.c.b16 %v764, %v760
    %v901 = vpack.c.b16 %v765, %v761
    %v902 = vpack.c.b16 %v766, %v762
    %v903 = vpack.c.b16 %v767, %v763
    %v904 = vpack.c.b16 %v772, %v768
    %v905 = vpack.c.b16 %v773, %v769
    %v906 = vpack.c.b16 %v774, %v770
    %v907 = vpack.c.b16 %v775, %v771
    %v908 = vpack.c.b16 %v780, %v776
    %v909 = vpack.c.b16 %v781, %v777
    %v910 = vpack.c.b16 %v782, %v778
    %v911 = vpack.c.b16 %v783, %v779
    %1040 = vmatpush.bf16.msra.mxu0 %v812
    %1041 = vmatpush.bf16.msra.mxu0 %v808
    %1042 = vmatpush.bf16.msra.mxu0 %v804
    %1043 = vmatpush.bf16.msra.mxu0 %v800
    %1044 = vmatpush.bf16.msra.mxu0 %v796
    %1045 = vmatpush.bf16.msra.mxu0 %v792
    %1046 = vmatpush.bf16.msra.mxu0 %v788
    %1047 = vmatpush.bf16.msra.mxu0 %v784
    %1048 = vmatmul.bf16.gmra.mxu0 %v268
    %v1049 = vpop.f32.mrf.mxu0
    %v1050 = vadd.f32 0.0, %v1049
    %v1051 = vpop.f32.mrf.mxu0
    %v1052 = vadd.f32 0.0, %v1051
    %1053 = vdwg.mxu0
    %1054 = vmatpush.bf16.msra.mxu0 %v844
    %1055 = vmatpush.bf16.msra.mxu0 %v840
    %1056 = vmatpush.bf16.msra.mxu0 %v836
    %1057 = vmatpush.bf16.msra.mxu0 %v832
    %1058 = vmatpush.bf16.msra.mxu0 %v828
    %1059 = vmatpush.bf16.msra.mxu0 %v824
    %1060 = vmatpush.bf16.msra.mxu0 %v820
    %1061 = vmatpush.bf16.msra.mxu0 %v816
    %1062 = vmatmul.bf16.gmra.mxu0 %v269
    %v1063 = vpop.f32.mrf.mxu0
    %v1064 = vadd.f32 %v1050, %v1063
    %v1065 = vpop.f32.mrf.mxu0
    %v1066 = vadd.f32 %v1052, %v1065
    %1067 = vdwg.mxu0
    %1068 = vmatpush.bf16.msra.mxu0 %v876
    %1069 = vmatpush.bf16.msra.mxu0 %v872
    %1070 = vmatpush.bf16.msra.mxu0 %v868
    %1071 = vmatpush.bf16.msra.mxu0 %v864
    %1072 = vmatpush.bf16.msra.mxu0 %v860
    %1073 = vmatpush.bf16.msra.mxu0 %v856
    %1074 = vmatpush.bf16.msra.mxu0 %v852
    %1075 = vmatpush.bf16.msra.mxu0 %v848
    %1076 = vmatmul.bf16.gmra.mxu0 %v270
    %v1077 = vpop.f32.mrf.mxu0
    %v1078 = vadd.f32 %v1064, %v1077
    %v1079 = vpop.f32.mrf.mxu0
    %v1080 = vadd.f32 %v1066, %v1079
    %1081 = vdwg.mxu0
    %1082 = vmatpush.bf16.msra.mxu0 %v908
    %1083 = vmatpush.bf16.msra.mxu0 %v904
    %1084 = vmatpush.bf16.msra.mxu0 %v900
    %1085 = vmatpush.bf16.msra.mxu0 %v896
    %1086 = vmatpush.bf16.msra.mxu0 %v892
    %1087 = vmatpush.bf16.msra.mxu0 %v888
    %1088 = vmatpush.bf16.msra.mxu0 %v884
    %1089 = vmatpush.bf16.msra.mxu0 %v880
    %1090 = vmatmul.bf16.gmra.mxu0 %v271
    %v1091 = vpop.f32.mrf.mxu0
    %v1092 = vadd.f32 %v1078, %v1091
    %v1093 = vpop.f32.mrf.mxu0
    %v1094 = vadd.f32 %v1080, %v1093
    %1095 = vdwg.mxu0
    %1096 = vmatpush.bf16.msra.mxu0 %v813
    %1097 = vmatpush.bf16.msra.mxu0 %v809
    %1098 = vmatpush.bf16.msra.mxu0 %v805
    %1099 = vmatpush.bf16.msra.mxu0 %v801
    %1100 = vmatpush.bf16.msra.mxu0 %v797
    %1101 = vmatpush.bf16.msra.mxu0 %v793
    %1102 = vmatpush.bf16.msra.mxu0 %v789
    %1103 = vmatpush.bf16.msra.mxu0 %v785
    %1104 = vmatmul.bf16.gmra.mxu0 %v268
    %v1105 = vpop.f32.mrf.mxu0
    %v1106 = vadd.f32 0.0, %v1105
    %v1107 = vpop.f32.mrf.mxu0
    %v1108 = vadd.f32 0.0, %v1107
    %1109 = vdwg.mxu0
    %1110 = vmatpush.bf16.msra.mxu0 %v845
    %1111 = vmatpush.bf16.msra.mxu0 %v841
    %1112 = vmatpush.bf16.msra.mxu0 %v837
    %1113 = vmatpush.bf16.msra.mxu0 %v833
    %1114 = vmatpush.bf16.msra.mxu0 %v829
    %1115 = vmatpush.bf16.msra.mxu0 %v825
    %1116 = vmatpush.bf16.msra.mxu0 %v821
    %1117 = vmatpush.bf16.msra.mxu0 %v817
    %1118 = vmatmul.bf16.gmra.mxu0 %v269
    %v1119 = vpop.f32.mrf.mxu0
    %v1120 = vadd.f32 %v1106, %v1119
    %v1121 = vpop.f32.mrf.mxu0
    %v1122 = vadd.f32 %v1108, %v1121
    %1123 = vdwg.mxu0
    %1124 = vmatpush.bf16.msra.mxu0 %v877
    %1125 = vmatpush.bf16.msra.mxu0 %v873
    %1126 = vmatpush.bf16.msra.mxu0 %v869
    %1127 = vmatpush.bf16.msra.mxu0 %v865
    %1128 = vmatpush.bf16.msra.mxu0 %v861
    %1129 = vmatpush.bf16.msra.mxu0 %v857
    %1130 = vmatpush.bf16.msra.mxu0 %v853
    %1131 = vmatpush.bf16.msra.mxu0 %v849
    %1132 = vmatmul.bf16.gmra.mxu0 %v270
    %v1133 = vpop.f32.mrf.mxu0
    %v1134 = vadd.f32 %v1120, %v1133
    %v1135 = vpop.f32.mrf.mxu0
    %v1136 = vadd.f32 %v1122, %v1135
    %1137 = vdwg.mxu0
    %1138 = vmatpush.bf16.msra.mxu0 %v909
    %1139 = vmatpush.bf16.msra.mxu0 %v905
    %1140 = vmatpush.bf16.msra.mxu0 %v901
    %1141 = vmatpush.bf16.msra.mxu0 %v897
    %1142 = vmatpush.bf16.msra.mxu0 %v893
    %1143 = vmatpush.bf16.msra.mxu0 %v889
    %1144 = vmatpush.bf16.msra.mxu0 %v885
    %1145 = vmatpush.bf16.msra.mxu0 %v881
    %1146 = vmatmul.bf16.gmra.mxu0 %v271
    %v1147 = vpop.f32.mrf.mxu0
    %v1148 = vadd.f32 %v1134, %v1147
    %v1149 = vpop.f32.mrf.mxu0
    %v1150 = vadd.f32 %v1136, %v1149
    %1151 = vdwg.mxu0
    %1152 = vmatpush.bf16.msra.mxu0 %v814
    %1153 = vmatpush.bf16.msra.mxu0 %v810
    %1154 = vmatpush.bf16.msra.mxu0 %v806
    %1155 = vmatpush.bf16.msra.mxu0 %v802
    %1156 = vmatpush.bf16.msra.mxu0 %v798
    %1157 = vmatpush.bf16.msra.mxu0 %v794
    %1158 = vmatpush.bf16.msra.mxu0 %v790
    %1159 = vmatpush.bf16.msra.mxu0 %v786
    %1160 = vmatmul.bf16.gmra.mxu0 %v268
    %v1161 = vpop.f32.mrf.mxu0
    %v1162 = vadd.f32 0.0, %v1161
    %v1163 = vpop.f32.mrf.mxu0
    %v1164 = vadd.f32 0.0, %v1163
    %1165 = vdwg.mxu0
    %1166 = vmatpush.bf16.msra.mxu0 %v846
    %1167 = vmatpush.bf16.msra.mxu0 %v842
    %1168 = vmatpush.bf16.msra.mxu0 %v838
    %1169 = vmatpush.bf16.msra.mxu0 %v834
    %1170 = vmatpush.bf16.msra.mxu0 %v830
    %1171 = vmatpush.bf16.msra.mxu0 %v826
    %1172 = vmatpush.bf16.msra.mxu0 %v822
    %1173 = vmatpush.bf16.msra.mxu0 %v818
    %1174 = vmatmul.bf16.gmra.mxu0 %v269
    %v1175 = vpop.f32.mrf.mxu0
    %v1176 = vadd.f32 %v1162, %v1175
    %v1177 = vpop.f32.mrf.mxu0
    %v1178 = vadd.f32 %v1164, %v1177
    %1179 = vdwg.mxu0
    %1180 = vmatpush.bf16.msra.mxu0 %v878
    %1181 = vmatpush.bf16.msra.mxu0 %v874
    %1182 = vmatpush.bf16.msra.mxu0 %v870
    %1183 = vmatpush.bf16.msra.mxu0 %v866
    %1184 = vmatpush.bf16.msra.mxu0 %v862
    %1185 = vmatpush.bf16.msra.mxu0 %v858
    %1186 = vmatpush.bf16.msra.mxu0 %v854
    %1187 = vmatpush.bf16.msra.mxu0 %v850
    %1188 = vmatmul.bf16.gmra.mxu0 %v270
    %v1189 = vpop.f32.mrf.mxu0
    %v1190 = vadd.f32 %v1176, %v1189
    %v1191 = vpop.f32.mrf.mxu0
    %v1192 = vadd.f32 %v1178, %v1191
    %1193 = vdwg.mxu0
    %1194 = vmatpush.bf16.msra.mxu0 %v910
    %1195 = vmatpush.bf16.msra.mxu0 %v906
    %1196 = vmatpush.bf16.msra.mxu0 %v902
    %1197 = vmatpush.bf16.msra.mxu0 %v898
    %1198 = vmatpush.bf16.msra.mxu0 %v894
    %1199 = vmatpush.bf16.msra.mxu0 %v890
    %1200 = vmatpush.bf16.msra.mxu0 %v886
    %1201 = vmatpush.bf16.msra.mxu0 %v882
    %1202 = vmatmul.bf16.gmra.mxu0 %v271
    %v1203 = vpop.f32.mrf.mxu0
    %v1204 = vadd.f32 %v1190, %v1203
    %v1205 = vpop.f32.mrf.mxu0
    %v1206 = vadd.f32 %v1192, %v1205
    %1207 = vdwg.mxu0
    %1208 = vmatpush.bf16.msra.mxu0 %v815
    %1209 = vmatpush.bf16.msra.mxu0 %v811
    %1210 = vmatpush.bf16.msra.mxu0 %v807
    %1211 = vmatpush.bf16.msra.mxu0 %v803
    %1212 = vmatpush.bf16.msra.mxu0 %v799
    %1213 = vmatpush.bf16.msra.mxu0 %v795
    %1214 = vmatpush.bf16.msra.mxu0 %v791
    %1215 = vmatpush.bf16.msra.mxu0 %v787
    %1216 = vmatmul.bf16.gmra.mxu0 %v268
    %v1217 = vpop.f32.mrf.mxu0
    %v1218 = vadd.f32 0.0, %v1217
    %v1219 = vpop.f32.mrf.mxu0
    %v1220 = vadd.f32 0.0, %v1219
    %1221 = vdwg.mxu0
    %1222 = vmatpush.bf16.msra.mxu0 %v847
    %1223 = vmatpush.bf16.msra.mxu0 %v843
    %1224 = vmatpush.bf16.msra.mxu0 %v839
    %1225 = vmatpush.bf16.msra.mxu0 %v835
    %1226 = vmatpush.bf16.msra.mxu0 %v831
    %1227 = vmatpush.bf16.msra.mxu0 %v827
    %1228 = vmatpush.bf16.msra.mxu0 %v823
    %1229 = vmatpush.bf16.msra.mxu0 %v819
    %1230 = vmatmul.bf16.gmra.mxu0 %v269
    %v1231 = vpop.f32.mrf.mxu0
    %v1232 = vadd.f32 %v1218, %v1231
    %v1233 = vpop.f32.mrf.mxu0
    %v1234 = vadd.f32 %v1220, %v1233
    %1235 = vdwg.mxu0
    %1236 = vmatpush.bf16.msra.mxu0 %v879
    %1237 = vmatpush.bf16.msra.mxu0 %v875
    %1238 = vmatpush.bf16.msra.mxu0 %v871
    %1239 = vmatpush.bf16.msra.mxu0 %v867
    %1240 = vmatpush.bf16.msra.mxu0 %v863
    %1241 = vmatpush.bf16.msra.mxu0 %v859
    %1242 = vmatpush.bf16.msra.mxu0 %v855
    %1243 = vmatpush.bf16.msra.mxu0 %v851
    %1244 = vmatmul.bf16.gmra.mxu0 %v270
    %v1245 = vpop.f32.mrf.mxu0
    %v1246 = vadd.f32 %v1232, %v1245
    %v1247 = vpop.f32.mrf.mxu0
    %v1248 = vadd.f32 %v1234, %v1247
    %1249 = vdwg.mxu0
    %1250 = vmatpush.bf16.msra.mxu0 %v911
    %1251 = vmatpush.bf16.msra.mxu0 %v907
    %1252 = vmatpush.bf16.msra.mxu0 %v903
    %1253 = vmatpush.bf16.msra.mxu0 %v899
    %1254 = vmatpush.bf16.msra.mxu0 %v895
    %1255 = vmatpush.bf16.msra.mxu0 %v891
    %1256 = vmatpush.bf16.msra.mxu0 %v887
    %1257 = vmatpush.bf16.msra.mxu0 %v883
    %1258 = vmatmul.bf16.gmra.mxu0 %v271
    %v1259 = vpop.f32.mrf.mxu0
    %v1260 = vadd.f32 %v1246, %v1259
    %v1261 = vpop.f32.mrf.mxu0
    %v1262 = vadd.f32 %v1248, %v1261
    %1263 = vdwg.mxu0
    %v1264 = vadd.f32 %v260, %v1092
    %v1265 = vadd.f32 %v261, %v1148
    %v1266 = vadd.f32 %v262, %v1204
    %v1267 = vadd.f32 %v263, %v1260
    %v1268 = vadd.f32 %v264, %v1094
    %v1269 = vadd.f32 %v265, %v1150
    %v1270 = vadd.f32 %v266, %v1206
    %v1271 = vadd.f32 %v267, %v1262
    %v1272 = vpack.c.bf16 %v206, %v202
    %v1273 = vpack.c.bf16 %v207, %v203
    %v1274 = vpack.c.bf16 %v208, %v204
    %v1275 = vpack.c.bf16 %v209, %v205
    %v1276 = vld [vmem:[#allocation6] sm:$0xff]
    %v1277 = vld [vmem:[#allocation6 + $0x8] sm:$0xff]
    %v1278 = vld [vmem:[#allocation6 + $0x10] sm:$0xff]
    %v1279 = vld [vmem:[#allocation6 + $0x18] sm:$0xff]
    %v1280 = vld [vmem:[#allocation6 + $0x20] sm:$0xff]
    %v1281 = vld [vmem:[#allocation6 + $0x28] sm:$0xff]
    %v1282 = vld [vmem:[#allocation6 + $0x30] sm:$0xff]
    %v1283 = vld [vmem:[#allocation6 + $0x38] sm:$0xff]
    %v1284 = vld [vmem:[#allocation6 + $0x40] sm:$0xff]
    %v1285 = vld [vmem:[#allocation6 + $0x48] sm:$0xff]
    %v1286 = vld [vmem:[#allocation6 + $0x50] sm:$0xff]
    %v1287 = vld [vmem:[#allocation6 + $0x58] sm:$0xff]
    %v1288 = vld [vmem:[#allocation6 + $0x60] sm:$0xff]
    %v1289 = vld [vmem:[#allocation6 + $0x68] sm:$0xff]
    %v1290 = vld [vmem:[#allocation6 + $0x70] sm:$0xff]
    %v1291 = vld [vmem:[#allocation6 + $0x78] sm:$0xff]
    %v1292 = vld [vmem:[#allocation6 + $0x80] sm:$0xff]
    %v1293 = vld [vmem:[#allocation6 + $0x88] sm:$0xff]
    %v1294 = vld [vmem:[#allocation6 + $0x90] sm:$0xff]
    %v1295 = vld [vmem:[#allocation6 + $0x98] sm:$0xff]
    %v1296 = vld [vmem:[#allocation6 + $0xa0] sm:$0xff]
    %v1297 = vld [vmem:[#allocation6 + $0xa8] sm:$0xff]
    %v1298 = vld [vmem:[#allocation6 + $0xb0] sm:$0xff]
    %v1299 = vld [vmem:[#allocation6 + $0xb8] sm:$0xff]
    %v1300 = vld [vmem:[#allocation6 + $0xc0] sm:$0xff]
    %v1301 = vld [vmem:[#allocation6 + $0xc8] sm:$0xff]
    %v1302 = vld [vmem:[#allocation6 + $0xd0] sm:$0xff]
    %v1303 = vld [vmem:[#allocation6 + $0xd8] sm:$0xff]
    %v1304 = vld [vmem:[#allocation6 + $0xe0] sm:$0xff]
    %v1305 = vld [vmem:[#allocation6 + $0xe8] sm:$0xff]
    %v1306 = vld [vmem:[#allocation6 + $0xf0] sm:$0xff]
    %v1307 = vld [vmem:[#allocation6 + $0xf8] sm:$0xff]
    %v1308 = vld [vmem:[#allocation6 + $0x100] sm:$0xff]
    %v1309 = vld [vmem:[#allocation6 + $0x108] sm:$0xff]
    %v1310 = vld [vmem:[#allocation6 + $0x110] sm:$0xff]
    %v1311 = vld [vmem:[#allocation6 + $0x118] sm:$0xff]
    %v1312 = vld [vmem:[#allocation6 + $0x120] sm:$0xff]
    %v1313 = vld [vmem:[#allocation6 + $0x128] sm:$0xff]
    %v1314 = vld [vmem:[#allocation6 + $0x130] sm:$0xff]
    %v1315 = vld [vmem:[#allocation6 + $0x138] sm:$0xff]
    %v1316 = vld [vmem:[#allocation6 + $0x140] sm:$0xff]
    %v1317 = vld [vmem:[#allocation6 + $0x148] sm:$0xff]
    %v1318 = vld [vmem:[#allocation6 + $0x150] sm:$0xff]
    %v1319 = vld [vmem:[#allocation6 + $0x158] sm:$0xff]
    %v1320 = vld [vmem:[#allocation6 + $0x160] sm:$0xff]
    %v1321 = vld [vmem:[#allocation6 + $0x168] sm:$0xff]
    %v1322 = vld [vmem:[#allocation6 + $0x170] sm:$0xff]
    %v1323 = vld [vmem:[#allocation6 + $0x178] sm:$0xff]
    %v1324 = vld [vmem:[#allocation6 + $0x180] sm:$0xff]
    %v1325 = vld [vmem:[#allocation6 + $0x188] sm:$0xff]
    %v1326 = vld [vmem:[#allocation6 + $0x190] sm:$0xff]
    %v1327 = vld [vmem:[#allocation6 + $0x198] sm:$0xff]
    %v1328 = vld [vmem:[#allocation6 + $0x1a0] sm:$0xff]
    %v1329 = vld [vmem:[#allocation6 + $0x1a8] sm:$0xff]
    %v1330 = vld [vmem:[#allocation6 + $0x1b0] sm:$0xff]
    %v1331 = vld [vmem:[#allocation6 + $0x1b8] sm:$0xff]
    %v1332 = vld [vmem:[#allocation6 + $0x1c0] sm:$0xff]
    %v1333 = vld [vmem:[#allocation6 + $0x1c8] sm:$0xff]
    %v1334 = vld [vmem:[#allocation6 + $0x1d0] sm:$0xff]
    %v1335 = vld [vmem:[#allocation6 + $0x1d8] sm:$0xff]
    %v1336 = vld [vmem:[#allocation6 + $0x1e0] sm:$0xff]
    %v1337 = vld [vmem:[#allocation6 + $0x1e8] sm:$0xff]
    %v1338 = vld [vmem:[#allocation6 + $0x1f0] sm:$0xff]
    %v1339 = vld [vmem:[#allocation6 + $0x1f8] sm:$0xff]
    %v1340 = vld [vmem:[#allocation6 + $0x200] sm:$0xff]
    %v1341 = vld [vmem:[#allocation6 + $0x208] sm:$0xff]
    %v1342 = vld [vmem:[#allocation6 + $0x210] sm:$0xff]
    %v1343 = vld [vmem:[#allocation6 + $0x218] sm:$0xff]
    %v1344 = vld [vmem:[#allocation6 + $0x220] sm:$0xff]
    %v1345 = vld [vmem:[#allocation6 + $0x228] sm:$0xff]
    %v1346 = vld [vmem:[#allocation6 + $0x230] sm:$0xff]
    %v1347 = vld [vmem:[#allocation6 + $0x238] sm:$0xff]
    %v1348 = vld [vmem:[#allocation6 + $0x240] sm:$0xff]
    %v1349 = vld [vmem:[#allocation6 + $0x248] sm:$0xff]
    %v1350 = vld [vmem:[#allocation6 + $0x250] sm:$0xff]
    %v1351 = vld [vmem:[#allocation6 + $0x258] sm:$0xff]
    %v1352 = vld [vmem:[#allocation6 + $0x260] sm:$0xff]
    %v1353 = vld [vmem:[#allocation6 + $0x268] sm:$0xff]
    %v1354 = vld [vmem:[#allocation6 + $0x270] sm:$0xff]
    %v1355 = vld [vmem:[#allocation6 + $0x278] sm:$0xff]
    %v1356 = vld [vmem:[#allocation6 + $0x280] sm:$0xff]
    %v1357 = vld [vmem:[#allocation6 + $0x288] sm:$0xff]
    %v1358 = vld [vmem:[#allocation6 + $0x290] sm:$0xff]
    %v1359 = vld [vmem:[#allocation6 + $0x298] sm:$0xff]
    %v1360 = vld [vmem:[#allocation6 + $0x2a0] sm:$0xff]
    %v1361 = vld [vmem:[#allocation6 + $0x2a8] sm:$0xff]
    %v1362 = vld [vmem:[#allocation6 + $0x2b0] sm:$0xff]
    %v1363 = vld [vmem:[#allocation6 + $0x2b8] sm:$0xff]
    %v1364 = vld [vmem:[#allocation6 + $0x2c0] sm:$0xff]
    %v1365 = vld [vmem:[#allocation6 + $0x2c8] sm:$0xff]
    %v1366 = vld [vmem:[#allocation6 + $0x2d0] sm:$0xff]
    %v1367 = vld [vmem:[#allocation6 + $0x2d8] sm:$0xff]
    %v1368 = vld [vmem:[#allocation6 + $0x2e0] sm:$0xff]
    %v1369 = vld [vmem:[#allocation6 + $0x2e8] sm:$0xff]
    %v1370 = vld [vmem:[#allocation6 + $0x2f0] sm:$0xff]
    %v1371 = vld [vmem:[#allocation6 + $0x2f8] sm:$0xff]
    %v1372 = vld [vmem:[#allocation6 + $0x300] sm:$0xff]
    %v1373 = vld [vmem:[#allocation6 + $0x308] sm:$0xff]
    %v1374 = vld [vmem:[#allocation6 + $0x310] sm:$0xff]
    %v1375 = vld [vmem:[#allocation6 + $0x318] sm:$0xff]
    %v1376 = vld [vmem:[#allocation6 + $0x320] sm:$0xff]
    %v1377 = vld [vmem:[#allocation6 + $0x328] sm:$0xff]
    %v1378 = vld [vmem:[#allocation6 + $0x330] sm:$0xff]
    %v1379 = vld [vmem:[#allocation6 + $0x338] sm:$0xff]
    %v1380 = vld [vmem:[#allocation6 + $0x340] sm:$0xff]
    %v1381 = vld [vmem:[#allocation6 + $0x348] sm:$0xff]
    %v1382 = vld [vmem:[#allocation6 + $0x350] sm:$0xff]
    %v1383 = vld [vmem:[#allocation6 + $0x358] sm:$0xff]
    %v1384 = vld [vmem:[#allocation6 + $0x360] sm:$0xff]
    %v1385 = vld [vmem:[#allocation6 + $0x368] sm:$0xff]
    %v1386 = vld [vmem:[#allocation6 + $0x370] sm:$0xff]
    %v1387 = vld [vmem:[#allocation6 + $0x378] sm:$0xff]
    %v1388 = vld [vmem:[#allocation6 + $0x380] sm:$0xff]
    %v1389 = vld [vmem:[#allocation6 + $0x388] sm:$0xff]
    %v1390 = vld [vmem:[#allocation6 + $0x390] sm:$0xff]
    %v1391 = vld [vmem:[#allocation6 + $0x398] sm:$0xff]
    %v1392 = vld [vmem:[#allocation6 + $0x3a0] sm:$0xff]
    %v1393 = vld [vmem:[#allocation6 + $0x3a8] sm:$0xff]
    %v1394 = vld [vmem:[#allocation6 + $0x3b0] sm:$0xff]
    %v1395 = vld [vmem:[#allocation6 + $0x3b8] sm:$0xff]
    %v1396 = vld [vmem:[#allocation6 + $0x3c0] sm:$0xff]
    %v1397 = vld [vmem:[#allocation6 + $0x3c8] sm:$0xff]
    %v1398 = vld [vmem:[#allocation6 + $0x3d0] sm:$0xff]
    %v1399 = vld [vmem:[#allocation6 + $0x3d8] sm:$0xff]
    %v1400 = vld [vmem:[#allocation6 + $0x3e0] sm:$0xff]
    %v1401 = vld [vmem:[#allocation6 + $0x3e8] sm:$0xff]
    %v1402 = vld [vmem:[#allocation6 + $0x3f0] sm:$0xff]
    %v1403 = vld [vmem:[#allocation6 + $0x3f8] sm:$0xff]
    %v1532 = vunpack.c.l.b16 %v1276
    %v1533 = vunpack.c.h.b16 %v1276
    %v1534 = vunpack.c.l.b16 %v1277
    %v1535 = vunpack.c.h.b16 %v1277
    %v1536 = vunpack.c.l.b16 %v1278
    %v1537 = vunpack.c.h.b16 %v1278
    %v1538 = vunpack.c.l.b16 %v1279
    %v1539 = vunpack.c.h.b16 %v1279
    %v1540 = vunpack.c.l.b16 %v1280
    %v1541 = vunpack.c.h.b16 %v1280
    %v1542 = vunpack.c.l.b16 %v1281
    %v1543 = vunpack.c.h.b16 %v1281
    %v1544 = vunpack.c.l.b16 %v1282
    %v1545 = vunpack.c.h.b16 %v1282
    %v1546 = vunpack.c.l.b16 %v1283
    %v1547 = vunpack.c.h.b16 %v1283
    %v1548 = vunpack.c.l.b16 %v1284
    %v1549 = vunpack.c.h.b16 %v1284
    %v1550 = vunpack.c.l.b16 %v1285
    %v1551 = vunpack.c.h.b16 %v1285
    %v1552 = vunpack.c.l.b16 %v1286
    %v1553 = vunpack.c.h.b16 %v1286
    %v1554 = vunpack.c.l.b16 %v1287
    %v1555 = vunpack.c.h.b16 %v1287
    %v1556 = vunpack.c.l.b16 %v1288
    %v1557 = vunpack.c.h.b16 %v1288
    %v1558 = vunpack.c.l.b16 %v1289
    %v1559 = vunpack.c.h.b16 %v1289
    %v1560 = vunpack.c.l.b16 %v1290
    %v1561 = vunpack.c.h.b16 %v1290
    %v1562 = vunpack.c.l.b16 %v1291
    %v1563 = vunpack.c.h.b16 %v1291
    %v1564 = vunpack.c.l.b16 %v1292
    %v1565 = vunpack.c.h.b16 %v1292
    %v1566 = vunpack.c.l.b16 %v1293
    %v1567 = vunpack.c.h.b16 %v1293
    %v1568 = vunpack.c.l.b16 %v1294
    %v1569 = vunpack.c.h.b16 %v1294
    %v1570 = vunpack.c.l.b16 %v1295
    %v1571 = vunpack.c.h.b16 %v1295
    %v1572 = vunpack.c.l.b16 %v1296
    %v1573 = vunpack.c.h.b16 %v1296
    %v1574 = vunpack.c.l.b16 %v1297
    %v1575 = vunpack.c.h.b16 %v1297
    %v1576 = vunpack.c.l.b16 %v1298
    %v1577 = vunpack.c.h.b16 %v1298
    %v1578 = vunpack.c.l.b16 %v1299
    %v1579 = vunpack.c.h.b16 %v1299
    %v1580 = vunpack.c.l.b16 %v1300
    %v1581 = vunpack.c.h.b16 %v1300
    %v1582 = vunpack.c.l.b16 %v1301
    %v1583 = vunpack.c.h.b16 %v1301
    %v1584 = vunpack.c.l.b16 %v1302
    %v1585 = vunpack.c.h.b16 %v1302
    %v1586 = vunpack.c.l.b16 %v1303
    %v1587 = vunpack.c.h.b16 %v1303
    %v1588 = vunpack.c.l.b16 %v1304
    %v1589 = vunpack.c.h.b16 %v1304
    %v1590 = vunpack.c.l.b16 %v1305
    %v1591 = vunpack.c.h.b16 %v1305
    %v1592 = vunpack.c.l.b16 %v1306
    %v1593 = vunpack.c.h.b16 %v1306
    %v1594 = vunpack.c.l.b16 %v1307
    %v1595 = vunpack.c.h.b16 %v1307
    %v1596 = vunpack.c.l.b16 %v1308
    %v1597 = vunpack.c.h.b16 %v1308
    %v1598 = vunpack.c.l.b16 %v1309
    %v1599 = vunpack.c.h.b16 %v1309
    %v1600 = vunpack.c.l.b16 %v1310
    %v1601 = vunpack.c.h.b16 %v1310
    %v1602 = vunpack.c.l.b16 %v1311
    %v1603 = vunpack.c.h.b16 %v1311
    %v1604 = vunpack.c.l.b16 %v1312
    %v1605 = vunpack.c.h.b16 %v1312
    %v1606 = vunpack.c.l.b16 %v1313
    %v1607 = vunpack.c.h.b16 %v1313
    %v1608 = vunpack.c.l.b16 %v1314
    %v1609 = vunpack.c.h.b16 %v1314
    %v1610 = vunpack.c.l.b16 %v1315
    %v1611 = vunpack.c.h.b16 %v1315
    %v1612 = vunpack.c.l.b16 %v1316
    %v1613 = vunpack.c.h.b16 %v1316
    %v1614 = vunpack.c.l.b16 %v1317
    %v1615 = vunpack.c.h.b16 %v1317
    %v1616 = vunpack.c.l.b16 %v1318
    %v1617 = vunpack.c.h.b16 %v1318
    %v1618 = vunpack.c.l.b16 %v1319
    %v1619 = vunpack.c.h.b16 %v1319
    %v1620 = vunpack.c.l.b16 %v1320
    %v1621 = vunpack.c.h.b16 %v1320
    %v1622 = vunpack.c.l.b16 %v1321
    %v1623 = vunpack.c.h.b16 %v1321
    %v1624 = vunpack.c.l.b16 %v1322
    %v1625 = vunpack.c.h.b16 %v1322
    %v1626 = vunpack.c.l.b16 %v1323
    %v1627 = vunpack.c.h.b16 %v1323
    %v1628 = vunpack.c.l.b16 %v1324
    %v1629 = vunpack.c.h.b16 %v1324
    %v1630 = vunpack.c.l.b16 %v1325
    %v1631 = vunpack.c.h.b16 %v1325
    %v1632 = vunpack.c.l.b16 %v1326
    %v1633 = vunpack.c.h.b16 %v1326
    %v1634 = vunpack.c.l.b16 %v1327
    %v1635 = vunpack.c.h.b16 %v1327
    %v1636 = vunpack.c.l.b16 %v1328
    %v1637 = vunpack.c.h.b16 %v1328
    %v1638 = vunpack.c.l.b16 %v1329
    %v1639 = vunpack.c.h.b16 %v1329
    %v1640 = vunpack.c.l.b16 %v1330
    %v1641 = vunpack.c.h.b16 %v1330
    %v1642 = vunpack.c.l.b16 %v1331
    %v1643 = vunpack.c.h.b16 %v1331
    %v1644 = vunpack.c.l.b16 %v1332
    %v1645 = vunpack.c.h.b16 %v1332
    %v1646 = vunpack.c.l.b16 %v1333
    %v1647 = vunpack.c.h.b16 %v1333
    %v1648 = vunpack.c.l.b16 %v1334
    %v1649 = vunpack.c.h.b16 %v1334
    %v1650 = vunpack.c.l.b16 %v1335
    %v1651 = vunpack.c.h.b16 %v1335
    %v1652 = vunpack.c.l.b16 %v1336
    %v1653 = vunpack.c.h.b16 %v1336
    %v1654 = vunpack.c.l.b16 %v1337
    %v1655 = vunpack.c.h.b16 %v1337
    %v1656 = vunpack.c.l.b16 %v1338
    %v1657 = vunpack.c.h.b16 %v1338
    %v1658 = vunpack.c.l.b16 %v1339
    %v1659 = vunpack.c.h.b16 %v1339
    %v1660 = vunpack.c.l.b16 %v1340
    %v1661 = vunpack.c.h.b16 %v1340
    %v1662 = vunpack.c.l.b16 %v1341
    %v1663 = vunpack.c.h.b16 %v1341
    %v1664 = vunpack.c.l.b16 %v1342
    %v1665 = vunpack.c.h.b16 %v1342
    %v1666 = vunpack.c.l.b16 %v1343
    %v1667 = vunpack.c.h.b16 %v1343
    %v1668 = vunpack.c.l.b16 %v1344
    %v1669 = vunpack.c.h.b16 %v1344
    %v1670 = vunpack.c.l.b16 %v1345
    %v1671 = vunpack.c.h.b16 %v1345
    %v1672 = vunpack.c.l.b16 %v1346
    %v1673 = vunpack.c.h.b16 %v1346
    %v1674 = vunpack.c.l.b16 %v1347
    %v1675 = vunpack.c.h.b16 %v1347
    %v1676 = vunpack.c.l.b16 %v1348
    %v1677 = vunpack.c.h.b16 %v1348
    %v1678 = vunpack.c.l.b16 %v1349
    %v1679 = vunpack.c.h.b16 %v1349
    %v1680 = vunpack.c.l.b16 %v1350
    %v1681 = vunpack.c.h.b16 %v1350
    %v1682 = vunpack.c.l.b16 %v1351
    %v1683 = vunpack.c.h.b16 %v1351
    %v1684 = vunpack.c.l.b16 %v1352
    %v1685 = vunpack.c.h.b16 %v1352
    %v1686 = vunpack.c.l.b16 %v1353
    %v1687 = vunpack.c.h.b16 %v1353
    %v1688 = vunpack.c.l.b16 %v1354
    %v1689 = vunpack.c.h.b16 %v1354
    %v1690 = vunpack.c.l.b16 %v1355
    %v1691 = vunpack.c.h.b16 %v1355
    %v1692 = vunpack.c.l.b16 %v1356
    %v1693 = vunpack.c.h.b16 %v1356
    %v1694 = vunpack.c.l.b16 %v1357
    %v1695 = vunpack.c.h.b16 %v1357
    %v1696 = vunpack.c.l.b16 %v1358
    %v1697 = vunpack.c.h.b16 %v1358
    %v1698 = vunpack.c.l.b16 %v1359
    %v1699 = vunpack.c.h.b16 %v1359
    %v1700 = vunpack.c.l.b16 %v1360
    %v1701 = vunpack.c.h.b16 %v1360
    %v1702 = vunpack.c.l.b16 %v1361
    %v1703 = vunpack.c.h.b16 %v1361
    %v1704 = vunpack.c.l.b16 %v1362
    %v1705 = vunpack.c.h.b16 %v1362
    %v1706 = vunpack.c.l.b16 %v1363
    %v1707 = vunpack.c.h.b16 %v1363
    %v1708 = vunpack.c.l.b16 %v1364
    %v1709 = vunpack.c.h.b16 %v1364
    %v1710 = vunpack.c.l.b16 %v1365
    %v1711 = vunpack.c.h.b16 %v1365
    %v1712 = vunpack.c.l.b16 %v1366
    %v1713 = vunpack.c.h.b16 %v1366
    %v1714 = vunpack.c.l.b16 %v1367
    %v1715 = vunpack.c.h.b16 %v1367
    %v1716 = vunpack.c.l.b16 %v1368
    %v1717 = vunpack.c.h.b16 %v1368
    %v1718 = vunpack.c.l.b16 %v1369
    %v1719 = vunpack.c.h.b16 %v1369
    %v1720 = vunpack.c.l.b16 %v1370
    %v1721 = vunpack.c.h.b16 %v1370
    %v1722 = vunpack.c.l.b16 %v1371
    %v1723 = vunpack.c.h.b16 %v1371
    %v1724 = vunpack.c.l.b16 %v1372
    %v1725 = vunpack.c.h.b16 %v1372
    %v1726 = vunpack.c.l.b16 %v1373
    %v1727 = vunpack.c.h.b16 %v1373
    %v1728 = vunpack.c.l.b16 %v1374
    %v1729 = vunpack.c.h.b16 %v1374
    %v1730 = vunpack.c.l.b16 %v1375
    %v1731 = vunpack.c.h.b16 %v1375
    %v1732 = vunpack.c.l.b16 %v1376
    %v1733 = vunpack.c.h.b16 %v1376
    %v1734 = vunpack.c.l.b16 %v1377
    %v1735 = vunpack.c.h.b16 %v1377
    %v1736 = vunpack.c.l.b16 %v1378
    %v1737 = vunpack.c.h.b16 %v1378
    %v1738 = vunpack.c.l.b16 %v1379
    %v1739 = vunpack.c.h.b16 %v1379
    %v1740 = vunpack.c.l.b16 %v1380
    %v1741 = vunpack.c.h.b16 %v1380
    %v1742 = vunpack.c.l.b16 %v1381
    %v1743 = vunpack.c.h.b16 %v1381
    %v1744 = vunpack.c.l.b16 %v1382
    %v1745 = vunpack.c.h.b16 %v1382
    %v1746 = vunpack.c.l.b16 %v1383
    %v1747 = vunpack.c.h.b16 %v1383
    %v1748 = vunpack.c.l.b16 %v1384
    %v1749 = vunpack.c.h.b16 %v1384
    %v1750 = vunpack.c.l.b16 %v1385
    %v1751 = vunpack.c.h.b16 %v1385
    %v1752 = vunpack.c.l.b16 %v1386
    %v1753 = vunpack.c.h.b16 %v1386
    %v1754 = vunpack.c.l.b16 %v1387
    %v1755 = vunpack.c.h.b16 %v1387
    %v1756 = vunpack.c.l.b16 %v1388
    %v1757 = vunpack.c.h.b16 %v1388
    %v1758 = vunpack.c.l.b16 %v1389
    %v1759 = vunpack.c.h.b16 %v1389
    %v1760 = vunpack.c.l.b16 %v1390
    %v1761 = vunpack.c.h.b16 %v1390
    %v1762 = vunpack.c.l.b16 %v1391
    %v1763 = vunpack.c.h.b16 %v1391
    %v1764 = vunpack.c.l.b16 %v1392
    %v1765 = vunpack.c.h.b16 %v1392
    %v1766 = vunpack.c.l.b16 %v1393
    %v1767 = vunpack.c.h.b16 %v1393
    %v1768 = vunpack.c.l.b16 %v1394
    %v1769 = vunpack.c.h.b16 %v1394
    %v1770 = vunpack.c.l.b16 %v1395
    %v1771 = vunpack.c.h.b16 %v1395
    %v1772 = vunpack.c.l.b16 %v1396
    %v1773 = vunpack.c.h.b16 %v1396
    %v1774 = vunpack.c.l.b16 %v1397
    %v1775 = vunpack.c.h.b16 %v1397
    %v1776 = vunpack.c.l.b16 %v1398
    %v1777 = vunpack.c.h.b16 %v1398
    %v1778 = vunpack.c.l.b16 %v1399
    %v1779 = vunpack.c.h.b16 %v1399
    %v1780 = vunpack.c.l.b16 %v1400
    %v1781 = vunpack.c.h.b16 %v1400
    %v1782 = vunpack.c.l.b16 %v1401
    %v1783 = vunpack.c.h.b16 %v1401
    %v1784 = vunpack.c.l.b16 %v1402
    %v1785 = vunpack.c.h.b16 %v1402
    %v1786 = vunpack.c.l.b16 %v1403
    %v1787 = vunpack.c.h.b16 %v1403
    %v1788 = vpack.c.b16 %v1536, %v1532
    %v1789 = vpack.c.b16 %v1537, %v1533
    %v1790 = vpack.c.b16 %v1538, %v1534
    %v1791 = vpack.c.b16 %v1539, %v1535
    %v1792 = vpack.c.b16 %v1544, %v1540
    %v1793 = vpack.c.b16 %v1545, %v1541
    %v1794 = vpack.c.b16 %v1546, %v1542
    %v1795 = vpack.c.b16 %v1547, %v1543
    %v1796 = vpack.c.b16 %v1552, %v1548
    %v1797 = vpack.c.b16 %v1553, %v1549
    %v1798 = vpack.c.b16 %v1554, %v1550
    %v1799 = vpack.c.b16 %v1555, %v1551
    %v1800 = vpack.c.b16 %v1560, %v1556
    %v1801 = vpack.c.b16 %v1561, %v1557
    %v1802 = vpack.c.b16 %v1562, %v1558
    %v1803 = vpack.c.b16 %v1563, %v1559
    %v1804 = vpack.c.b16 %v1568, %v1564
    %v1805 = vpack.c.b16 %v1569, %v1565
    %v1806 = vpack.c.b16 %v1570, %v1566
    %v1807 = vpack.c.b16 %v1571, %v1567
    %v1808 = vpack.c.b16 %v1576, %v1572
    %v1809 = vpack.c.b16 %v1577, %v1573
    %v1810 = vpack.c.b16 %v1578, %v1574
    %v1811 = vpack.c.b16 %v1579, %v1575
    %v1812 = vpack.c.b16 %v1584, %v1580
    %v1813 = vpack.c.b16 %v1585, %v1581
    %v1814 = vpack.c.b16 %v1586, %v1582
    %v1815 = vpack.c.b16 %v1587, %v1583
    %v1816 = vpack.c.b16 %v1592, %v1588
    %v1817 = vpack.c.b16 %v1593, %v1589
    %v1818 = vpack.c.b16 %v1594, %v1590
    %v1819 = vpack.c.b16 %v1595, %v1591
    %v1820 = vpack.c.b16 %v1600, %v1596
    %v1821 = vpack.c.b16 %v1601, %v1597
    %v1822 = vpack.c.b16 %v1602, %v1598
    %v1823 = vpack.c.b16 %v1603, %v1599
    %v1824 = vpack.c.b16 %v1608, %v1604
    %v1825 = vpack.c.b16 %v1609, %v1605
    %v1826 = vpack.c.b16 %v1610, %v1606
    %v1827 = vpack.c.b16 %v1611, %v1607
    %v1828 = vpack.c.b16 %v1616, %v1612
    %v1829 = vpack.c.b16 %v1617, %v1613
    %v1830 = vpack.c.b16 %v1618, %v1614
    %v1831 = vpack.c.b16 %v1619, %v1615
    %v1832 = vpack.c.b16 %v1624, %v1620
    %v1833 = vpack.c.b16 %v1625, %v1621
    %v1834 = vpack.c.b16 %v1626, %v1622
    %v1835 = vpack.c.b16 %v1627, %v1623
    %v1836 = vpack.c.b16 %v1632, %v1628
    %v1837 = vpack.c.b16 %v1633, %v1629
    %v1838 = vpack.c.b16 %v1634, %v1630
    %v1839 = vpack.c.b16 %v1635, %v1631
    %v1840 = vpack.c.b16 %v1640, %v1636
    %v1841 = vpack.c.b16 %v1641, %v1637
    %v1842 = vpack.c.b16 %v1642, %v1638
    %v1843 = vpack.c.b16 %v1643, %v1639
    %v1844 = vpack.c.b16 %v1648, %v1644
    %v1845 = vpack.c.b16 %v1649, %v1645
    %v1846 = vpack.c.b16 %v1650, %v1646
    %v1847 = vpack.c.b16 %v1651, %v1647
    %v1848 = vpack.c.b16 %v1656, %v1652
    %v1849 = vpack.c.b16 %v1657, %v1653
    %v1850 = vpack.c.b16 %v1658, %v1654
    %v1851 = vpack.c.b16 %v1659, %v1655
    %v1852 = vpack.c.b16 %v1664, %v1660
    %v1853 = vpack.c.b16 %v1665, %v1661
    %v1854 = vpack.c.b16 %v1666, %v1662
    %v1855 = vpack.c.b16 %v1667, %v1663
    %v1856 = vpack.c.b16 %v1672, %v1668
    %v1857 = vpack.c.b16 %v1673, %v1669
    %v1858 = vpack.c.b16 %v1674, %v1670
    %v1859 = vpack.c.b16 %v1675, %v1671
    %v1860 = vpack.c.b16 %v1680, %v1676
    %v1861 = vpack.c.b16 %v1681, %v1677
    %v1862 = vpack.c.b16 %v1682, %v1678
    %v1863 = vpack.c.b16 %v1683, %v1679
    %v1864 = vpack.c.b16 %v1688, %v1684
    %v1865 = vpack.c.b16 %v1689, %v1685
    %v1866 = vpack.c.b16 %v1690, %v1686
    %v1867 = vpack.c.b16 %v1691, %v1687
    %v1868 = vpack.c.b16 %v1696, %v1692
    %v1869 = vpack.c.b16 %v1697, %v1693
    %v1870 = vpack.c.b16 %v1698, %v1694
    %v1871 = vpack.c.b16 %v1699, %v1695
    %v1872 = vpack.c.b16 %v1704, %v1700
    %v1873 = vpack.c.b16 %v1705, %v1701
    %v1874 = vpack.c.b16 %v1706, %v1702
    %v1875 = vpack.c.b16 %v1707, %v1703
    %v1876 = vpack.c.b16 %v1712, %v1708
    %v1877 = vpack.c.b16 %v1713, %v1709
    %v1878 = vpack.c.b16 %v1714, %v1710
    %v1879 = vpack.c.b16 %v1715, %v1711
    %v1880 = vpack.c.b16 %v1720, %v1716
    %v1881 = vpack.c.b16 %v1721, %v1717
    %v1882 = vpack.c.b16 %v1722, %v1718
    %v1883 = vpack.c.b16 %v1723, %v1719
    %v1884 = vpack.c.b16 %v1728, %v1724
    %v1885 = vpack.c.b16 %v1729, %v1725
    %v1886 = vpack.c.b16 %v1730, %v1726
    %v1887 = vpack.c.b16 %v1731, %v1727
    %v1888 = vpack.c.b16 %v1736, %v1732
    %v1889 = vpack.c.b16 %v1737, %v1733
    %v1890 = vpack.c.b16 %v1738, %v1734
    %v1891 = vpack.c.b16 %v1739, %v1735
    %v1892 = vpack.c.b16 %v1744, %v1740
    %v1893 = vpack.c.b16 %v1745, %v1741
    %v1894 = vpack.c.b16 %v1746, %v1742
    %v1895 = vpack.c.b16 %v1747, %v1743
    %v1896 = vpack.c.b16 %v1752, %v1748
    %v1897 = vpack.c.b16 %v1753, %v1749
    %v1898 = vpack.c.b16 %v1754, %v1750
    %v1899 = vpack.c.b16 %v1755, %v1751
    %v1900 = vpack.c.b16 %v1760, %v1756
    %v1901 = vpack.c.b16 %v1761, %v1757
    %v1902 = vpack.c.b16 %v1762, %v1758
    %v1903 = vpack.c.b16 %v1763, %v1759
    %v1904 = vpack.c.b16 %v1768, %v1764
    %v1905 = vpack.c.b16 %v1769, %v1765
    %v1906 = vpack.c.b16 %v1770, %v1766
    %v1907 = vpack.c.b16 %v1771, %v1767
    %v1908 = vpack.c.b16 %v1776, %v1772
    %v1909 = vpack.c.b16 %v1777, %v1773
    %v1910 = vpack.c.b16 %v1778, %v1774
    %v1911 = vpack.c.b16 %v1779, %v1775
    %v1912 = vpack.c.b16 %v1784, %v1780
    %v1913 = vpack.c.b16 %v1785, %v1781
    %v1914 = vpack.c.b16 %v1786, %v1782
    %v1915 = vpack.c.b16 %v1787, %v1783
    %2044 = vmatpush.bf16.msra.mxu0 %v1816
    %2045 = vmatpush.bf16.msra.mxu0 %v1812
    %2046 = vmatpush.bf16.msra.mxu0 %v1808
    %2047 = vmatpush.bf16.msra.mxu0 %v1804
    %2048 = vmatpush.bf16.msra.mxu0 %v1800
    %2049 = vmatpush.bf16.msra.mxu0 %v1796
    %2050 = vmatpush.bf16.msra.mxu0 %v1792
    %2051 = vmatpush.bf16.msra.mxu0 %v1788
    %2052 = vmatmul.bf16.gmra.mxu0 %v1272
    %v2053 = vpop.f32.mrf.mxu0
    %v2054 = vadd.f32 0.0, %v2053
    %v2055 = vpop.f32.mrf.mxu0
    %v2056 = vadd.f32 0.0, %v2055
    %2057 = vdwg.mxu0
    %2058 = vmatpush.bf16.msra.mxu0 %v1848
    %2059 = vmatpush.bf16.msra.mxu0 %v1844
    %2060 = vmatpush.bf16.msra.mxu0 %v1840
    %2061 = vmatpush.bf16.msra.mxu0 %v1836
    %2062 = vmatpush.bf16.msra.mxu0 %v1832
    %2063 = vmatpush.bf16.msra.mxu0 %v1828
    %2064 = vmatpush.bf16.msra.mxu0 %v1824
    %2065 = vmatpush.bf16.msra.mxu0 %v1820
    %2066 = vmatmul.bf16.gmra.mxu0 %v1273
    %v2067 = vpop.f32.mrf.mxu0
    %v2068 = vadd.f32 %v2054, %v2067
    %v2069 = vpop.f32.mrf.mxu0
    %v2070 = vadd.f32 %v2056, %v2069
    %2071 = vdwg.mxu0
    %2072 = vmatpush.bf16.msra.mxu0 %v1880
    %2073 = vmatpush.bf16.msra.mxu0 %v1876
    %2074 = vmatpush.bf16.msra.mxu0 %v1872
    %2075 = vmatpush.bf16.msra.mxu0 %v1868
    %2076 = vmatpush.bf16.msra.mxu0 %v1864
    %2077 = vmatpush.bf16.msra.mxu0 %v1860
    %2078 = vmatpush.bf16.msra.mxu0 %v1856
    %2079 = vmatpush.bf16.msra.mxu0 %v1852
    %2080 = vmatmul.bf16.gmra.mxu0 %v1274
    %v2081 = vpop.f32.mrf.mxu0
    %v2082 = vadd.f32 %v2068, %v2081
    %v2083 = vpop.f32.mrf.mxu0
    %v2084 = vadd.f32 %v2070, %v2083
    %2085 = vdwg.mxu0
    %2086 = vmatpush.bf16.msra.mxu0 %v1912
    %2087 = vmatpush.bf16.msra.mxu0 %v1908
    %2088 = vmatpush.bf16.msra.mxu0 %v1904
    %2089 = vmatpush.bf16.msra.mxu0 %v1900
    %2090 = vmatpush.bf16.msra.mxu0 %v1896
    %2091 = vmatpush.bf16.msra.mxu0 %v1892
    %2092 = vmatpush.bf16.msra.mxu0 %v1888
    %2093 = vmatpush.bf16.msra.mxu0 %v1884
    %2094 = vmatmul.bf16.gmra.mxu0 %v1275
    %v2095 = vpop.f32.mrf.mxu0
    %v2096 = vadd.f32 %v2082, %v2095
    %v2097 = vpop.f32.mrf.mxu0
    %v2098 = vadd.f32 %v2084, %v2097
    %2099 = vdwg.mxu0
    %2100 = vmatpush.bf16.msra.mxu0 %v1817
    %2101 = vmatpush.bf16.msra.mxu0 %v1813
    %2102 = vmatpush.bf16.msra.mxu0 %v1809
    %2103 = vmatpush.bf16.msra.mxu0 %v1805
    %2104 = vmatpush.bf16.msra.mxu0 %v1801
    %2105 = vmatpush.bf16.msra.mxu0 %v1797
    %2106 = vmatpush.bf16.msra.mxu0 %v1793
    %2107 = vmatpush.bf16.msra.mxu0 %v1789
    %2108 = vmatmul.bf16.gmra.mxu0 %v1272
    %v2109 = vpop.f32.mrf.mxu0
    %v2110 = vadd.f32 0.0, %v2109
    %v2111 = vpop.f32.mrf.mxu0
    %v2112 = vadd.f32 0.0, %v2111
    %2113 = vdwg.mxu0
    %2114 = vmatpush.bf16.msra.mxu0 %v1849
    %2115 = vmatpush.bf16.msra.mxu0 %v1845
    %2116 = vmatpush.bf16.msra.mxu0 %v1841
    %2117 = vmatpush.bf16.msra.mxu0 %v1837
    %2118 = vmatpush.bf16.msra.mxu0 %v1833
    %2119 = vmatpush.bf16.msra.mxu0 %v1829
    %2120 = vmatpush.bf16.msra.mxu0 %v1825
    %2121 = vmatpush.bf16.msra.mxu0 %v1821
    %2122 = vmatmul.bf16.gmra.mxu0 %v1273
    %v2123 = vpop.f32.mrf.mxu0
    %v2124 = vadd.f32 %v2110, %v2123
    %v2125 = vpop.f32.mrf.mxu0
    %v2126 = vadd.f32 %v2112, %v2125
    %2127 = vdwg.mxu0
    %2128 = vmatpush.bf16.msra.mxu0 %v1881
    %2129 = vmatpush.bf16.msra.mxu0 %v1877
    %2130 = vmatpush.bf16.msra.mxu0 %v1873
    %2131 = vmatpush.bf16.msra.mxu0 %v1869
    %2132 = vmatpush.bf16.msra.mxu0 %v1865
    %2133 = vmatpush.bf16.msra.mxu0 %v1861
    %2134 = vmatpush.bf16.msra.mxu0 %v1857
    %2135 = vmatpush.bf16.msra.mxu0 %v1853
    %2136 = vmatmul.bf16.gmra.mxu0 %v1274
    %v2137 = vpop.f32.mrf.mxu0
    %v2138 = vadd.f32 %v2124, %v2137
    %v2139 = vpop.f32.mrf.mxu0
    %v2140 = vadd.f32 %v2126, %v2139
    %2141 = vdwg.mxu0
    %2142 = vmatpush.bf16.msra.mxu0 %v1913
    %2143 = vmatpush.bf16.msra.mxu0 %v1909
    %2144 = vmatpush.bf16.msra.mxu0 %v1905
    %2145 = vmatpush.bf16.msra.mxu0 %v1901
    %2146 = vmatpush.bf16.msra.mxu0 %v1897
    %2147 = vmatpush.bf16.msra.mxu0 %v1893
    %2148 = vmatpush.bf16.msra.mxu0 %v1889
    %2149 = vmatpush.bf16.msra.mxu0 %v1885
    %2150 = vmatmul.bf16.gmra.mxu0 %v1275
    %v2151 = vpop.f32.mrf.mxu0
    %v2152 = vadd.f32 %v2138, %v2151
    %v2153 = vpop.f32.mrf.mxu0
    %v2154 = vadd.f32 %v2140, %v2153
    %2155 = vdwg.mxu0
    %2156 = vmatpush.bf16.msra.mxu0 %v1818
    %2157 = vmatpush.bf16.msra.mxu0 %v1814
    %2158 = vmatpush.bf16.msra.mxu0 %v1810
    %2159 = vmatpush.bf16.msra.mxu0 %v1806
    %2160 = vmatpush.bf16.msra.mxu0 %v1802
    %2161 = vmatpush.bf16.msra.mxu0 %v1798
    %2162 = vmatpush.bf16.msra.mxu0 %v1794
    %2163 = vmatpush.bf16.msra.mxu0 %v1790
    %2164 = vmatmul.bf16.gmra.mxu0 %v1272
    %v2165 = vpop.f32.mrf.mxu0
    %v2166 = vadd.f32 0.0, %v2165
    %v2167 = vpop.f32.mrf.mxu0
    %v2168 = vadd.f32 0.0, %v2167
    %2169 = vdwg.mxu0
    %2170 = vmatpush.bf16.msra.mxu0 %v1850
    %2171 = vmatpush.bf16.msra.mxu0 %v1846
    %2172 = vmatpush.bf16.msra.mxu0 %v1842
    %2173 = vmatpush.bf16.msra.mxu0 %v1838
    %2174 = vmatpush.bf16.msra.mxu0 %v1834
    %2175 = vmatpush.bf16.msra.mxu0 %v1830
    %2176 = vmatpush.bf16.msra.mxu0 %v1826
    %2177 = vmatpush.bf16.msra.mxu0 %v1822
    %2178 = vmatmul.bf16.gmra.mxu0 %v1273
    %v2179 = vpop.f32.mrf.mxu0
    %v2180 = vadd.f32 %v2166, %v2179
    %v2181 = vpop.f32.mrf.mxu0
    %v2182 = vadd.f32 %v2168, %v2181
    %2183 = vdwg.mxu0
    %2184 = vmatpush.bf16.msra.mxu0 %v1882
    %2185 = vmatpush.bf16.msra.mxu0 %v1878
    %2186 = vmatpush.bf16.msra.mxu0 %v1874
    %2187 = vmatpush.bf16.msra.mxu0 %v1870
    %2188 = vmatpush.bf16.msra.mxu0 %v1866
    %2189 = vmatpush.bf16.msra.mxu0 %v1862
    %2190 = vmatpush.bf16.msra.mxu0 %v1858
    %2191 = vmatpush.bf16.msra.mxu0 %v1854
    %2192 = vmatmul.bf16.gmra.mxu0 %v1274
    %v2193 = vpop.f32.mrf.mxu0
    %v2194 = vadd.f32 %v2180, %v2193
    %v2195 = vpop.f32.mrf.mxu0
    %v2196 = vadd.f32 %v2182, %v2195
    %2197 = vdwg.mxu0
    %2198 = vmatpush.bf16.msra.mxu0 %v1914
    %2199 = vmatpush.bf16.msra.mxu0 %v1910
    %2200 = vmatpush.bf16.msra.mxu0 %v1906
    %2201 = vmatpush.bf16.msra.mxu0 %v1902
    %2202 = vmatpush.bf16.msra.mxu0 %v1898
    %2203 = vmatpush.bf16.msra.mxu0 %v1894
    %2204 = vmatpush.bf16.msra.mxu0 %v1890
    %2205 = vmatpush.bf16.msra.mxu0 %v1886
    %2206 = vmatmul.bf16.gmra.mxu0 %v1275
    %v2207 = vpop.f32.mrf.mxu0
    %v2208 = vadd.f32 %v2194, %v2207
    %v2209 = vpop.f32.mrf.mxu0
    %v2210 = vadd.f32 %v2196, %v2209
    %2211 = vdwg.mxu0
    %2212 = vmatpush.bf16.msra.mxu0 %v1819
    %2213 = vmatpush.bf16.msra.mxu0 %v1815
    %2214 = vmatpush.bf16.msra.mxu0 %v1811
    %2215 = vmatpush.bf16.msra.mxu0 %v1807
    %2216 = vmatpush.bf16.msra.mxu0 %v1803
    %2217 = vmatpush.bf16.msra.mxu0 %v1799
    %2218 = vmatpush.bf16.msra.mxu0 %v1795
    %2219 = vmatpush.bf16.msra.mxu0 %v1791
    %2220 = vmatmul.bf16.gmra.mxu0 %v1272
    %v2221 = vpop.f32.mrf.mxu0
    %v2222 = vadd.f32 0.0, %v2221
    %v2223 = vpop.f32.mrf.mxu0
    %v2224 = vadd.f32 0.0, %v2223
    %2225 = vdwg.mxu0
    %2226 = vmatpush.bf16.msra.mxu0 %v1851
    %2227 = vmatpush.bf16.msra.mxu0 %v1847
    %2228 = vmatpush.bf16.msra.mxu0 %v1843
    %2229 = vmatpush.bf16.msra.mxu0 %v1839
    %2230 = vmatpush.bf16.msra.mxu0 %v1835
    %2231 = vmatpush.bf16.msra.mxu0 %v1831
    %2232 = vmatpush.bf16.msra.mxu0 %v1827
    %2233 = vmatpush.bf16.msra.mxu0 %v1823
    %2234 = vmatmul.bf16.gmra.mxu0 %v1273
    %v2235 = vpop.f32.mrf.mxu0
    %v2236 = vadd.f32 %v2222, %v2235
    %v2237 = vpop.f32.mrf.mxu0
    %v2238 = vadd.f32 %v2224, %v2237
    %2239 = vdwg.mxu0
    %2240 = vmatpush.bf16.msra.mxu0 %v1883
    %2241 = vmatpush.bf16.msra.mxu0 %v1879
    %2242 = vmatpush.bf16.msra.mxu0 %v1875
    %2243 = vmatpush.bf16.msra.mxu0 %v1871
    %2244 = vmatpush.bf16.msra.mxu0 %v1867
    %2245 = vmatpush.bf16.msra.mxu0 %v1863
    %2246 = vmatpush.bf16.msra.mxu0 %v1859
    %2247 = vmatpush.bf16.msra.mxu0 %v1855
    %2248 = vmatmul.bf16.gmra.mxu0 %v1274
    %v2249 = vpop.f32.mrf.mxu0
    %v2250 = vadd.f32 %v2236, %v2249
    %v2251 = vpop.f32.mrf.mxu0
    %v2252 = vadd.f32 %v2238, %v2251
    %2253 = vdwg.mxu0
    %2254 = vmatpush.bf16.msra.mxu0 %v1915
    %2255 = vmatpush.bf16.msra.mxu0 %v1911
    %2256 = vmatpush.bf16.msra.mxu0 %v1907
    %2257 = vmatpush.bf16.msra.mxu0 %v1903
    %2258 = vmatpush.bf16.msra.mxu0 %v1899
    %2259 = vmatpush.bf16.msra.mxu0 %v1895
    %2260 = vmatpush.bf16.msra.mxu0 %v1891
    %2261 = vmatpush.bf16.msra.mxu0 %v1887
    %2262 = vmatmul.bf16.gmra.mxu0 %v1275
    %v2263 = vpop.f32.mrf.mxu0
    %v2264 = vadd.f32 %v2250, %v2263
    %v2265 = vpop.f32.mrf.mxu0
    %v2266 = vadd.f32 %v2252, %v2265
    %2267 = vdwg.mxu0
    %v2268 = vadd.f32 %v1264, %v2096
    %v2269 = vadd.f32 %v1265, %v2152
    %v2270 = vadd.f32 %v1266, %v2208
    %v2271 = vadd.f32 %v1267, %v2264
    %v2272 = vadd.f32 %v1268, %v2098
    %v2273 = vadd.f32 %v1269, %v2154
    %v2274 = vadd.f32 %v1270, %v2210
    %v2275 = vadd.f32 %v1271, %v2266
    %v2276 = vmax.f32 %v2268, 0.0
    %v2277 = vmax.f32 %v2269, 0.0
    %v2278 = vmax.f32 %v2270, 0.0
    %v2279 = vmax.f32 %v2271, 0.0
    %v2280 = vmax.f32 %v2272, 0.0
    %v2281 = vmax.f32 %v2273, 0.0
    %v2282 = vmax.f32 %v2274, 0.0
    %v2283 = vmax.f32 %v2275, 0.0
    %v2284 = vpack.c.bf16 %v2280, %v2276
    %v2285 = vpack.c.bf16 %v2281, %v2277
    %v2286 = vpack.c.bf16 %v2282, %v2278
    %v2287 = vpack.c.bf16 %v2283, %v2279
    %v2288 = vld [vmem:[#allocation8] sm:$0xf]
    %v2289 = vld [vmem:[#allocation8 + $0x4] sm:$0xf]
    %v2290 = vld [vmem:[#allocation8 + $0x8] sm:$0xf]
    %v2291 = vld [vmem:[#allocation8 + $0xc] sm:$0xf]
    %v2292 = vld [vmem:[#allocation8 + $0x10] sm:$0xf]
    %v2293 = vld [vmem:[#allocation8 + $0x14] sm:$0xf]
    %v2294 = vld [vmem:[#allocation8 + $0x18] sm:$0xf]
    %v2295 = vld [vmem:[#allocation8 + $0x1c] sm:$0xf]
    %v2296 = vld [vmem:[#allocation8 + $0x20] sm:$0xf]
    %v2297 = vld [vmem:[#allocation8 + $0x24] sm:$0xf]
    %v2298 = vld [vmem:[#allocation8 + $0x28] sm:$0xf]
    %v2299 = vld [vmem:[#allocation8 + $0x2c] sm:$0xf]
    %v2300 = vld [vmem:[#allocation8 + $0x30] sm:$0xf]
    %v2301 = vld [vmem:[#allocation8 + $0x34] sm:$0xf]
    %v2302 = vld [vmem:[#allocation8 + $0x38] sm:$0xf]
    %v2303 = vld [vmem:[#allocation8 + $0x3c] sm:$0xf]
    %v2304 = vld [vmem:[#allocation8 + $0x40] sm:$0xf]
    %v2305 = vld [vmem:[#allocation8 + $0x44] sm:$0xf]
    %v2306 = vld [vmem:[#allocation8 + $0x48] sm:$0xf]
    %v2307 = vld [vmem:[#allocation8 + $0x4c] sm:$0xf]
    %v2308 = vld [vmem:[#allocation8 + $0x50] sm:$0xf]
    %v2309 = vld [vmem:[#allocation8 + $0x54] sm:$0xf]
    %v2310 = vld [vmem:[#allocation8 + $0x58] sm:$0xf]
    %v2311 = vld [vmem:[#allocation8 + $0x5c] sm:$0xf]
    %v2312 = vld [vmem:[#allocation8 + $0x60] sm:$0xf]
    %v2313 = vld [vmem:[#allocation8 + $0x64] sm:$0xf]
    %v2314 = vld [vmem:[#allocation8 + $0x68] sm:$0xf]
    %v2315 = vld [vmem:[#allocation8 + $0x6c] sm:$0xf]
    %v2316 = vld [vmem:[#allocation8 + $0x70] sm:$0xf]
    %v2317 = vld [vmem:[#allocation8 + $0x74] sm:$0xf]
    %v2318 = vld [vmem:[#allocation8 + $0x78] sm:$0xf]
    %v2319 = vld [vmem:[#allocation8 + $0x7c] sm:$0xf]
    %v2320 = vld [vmem:[#allocation8 + $0x80] sm:$0xf]
    %v2321 = vld [vmem:[#allocation8 + $0x84] sm:$0xf]
    %v2322 = vld [vmem:[#allocation8 + $0x88] sm:$0xf]
    %v2323 = vld [vmem:[#allocation8 + $0x8c] sm:$0xf]
    %v2324 = vld [vmem:[#allocation8 + $0x90] sm:$0xf]
    %v2325 = vld [vmem:[#allocation8 + $0x94] sm:$0xf]
    %v2326 = vld [vmem:[#allocation8 + $0x98] sm:$0xf]
    %v2327 = vld [vmem:[#allocation8 + $0x9c] sm:$0xf]
    %v2328 = vld [vmem:[#allocation8 + $0xa0] sm:$0xf]
    %v2329 = vld [vmem:[#allocation8 + $0xa4] sm:$0xf]
    %v2330 = vld [vmem:[#allocation8 + $0xa8] sm:$0xf]
    %v2331 = vld [vmem:[#allocation8 + $0xac] sm:$0xf]
    %v2332 = vld [vmem:[#allocation8 + $0xb0] sm:$0xf]
    %v2333 = vld [vmem:[#allocation8 + $0xb4] sm:$0xf]
    %v2334 = vld [vmem:[#allocation8 + $0xb8] sm:$0xf]
    %v2335 = vld [vmem:[#allocation8 + $0xbc] sm:$0xf]
    %v2336 = vld [vmem:[#allocation8 + $0xc0] sm:$0xf]
    %v2337 = vld [vmem:[#allocation8 + $0xc4] sm:$0xf]
    %v2338 = vld [vmem:[#allocation8 + $0xc8] sm:$0xf]
    %v2339 = vld [vmem:[#allocation8 + $0xcc] sm:$0xf]
    %v2340 = vld [vmem:[#allocation8 + $0xd0] sm:$0xf]
    %v2341 = vld [vmem:[#allocation8 + $0xd4] sm:$0xf]
    %v2342 = vld [vmem:[#allocation8 + $0xd8] sm:$0xf]
    %v2343 = vld [vmem:[#allocation8 + $0xdc] sm:$0xf]
    %v2344 = vld [vmem:[#allocation8 + $0xe0] sm:$0xf]
    %v2345 = vld [vmem:[#allocation8 + $0xe4] sm:$0xf]
    %v2346 = vld [vmem:[#allocation8 + $0xe8] sm:$0xf]
    %v2347 = vld [vmem:[#allocation8 + $0xec] sm:$0xf]
    %v2348 = vld [vmem:[#allocation8 + $0xf0] sm:$0xf]
    %v2349 = vld [vmem:[#allocation8 + $0xf4] sm:$0xf]
    %v2350 = vld [vmem:[#allocation8 + $0xf8] sm:$0xf]
    %v2351 = vld [vmem:[#allocation8 + $0xfc] sm:$0xf]
    %v2352 = vld [vmem:[%s8] sm:$0x1]
    %v2354 = vperm.slane %v2352, 0
    %v2420 = vunpack.c.l.b16 %v2288
    %v2421 = vunpack.c.l.b16 %v2289
    %v2422 = vunpack.c.l.b16 %v2290
    %v2423 = vunpack.c.l.b16 %v2291
    %v2424 = vunpack.c.l.b16 %v2292
    %v2425 = vunpack.c.l.b16 %v2293
    %v2426 = vunpack.c.l.b16 %v2294
    %v2427 = vunpack.c.l.b16 %v2295
    %v2428 = vunpack.c.l.b16 %v2296
    %v2429 = vunpack.c.l.b16 %v2297
    %v2430 = vunpack.c.l.b16 %v2298
    %v2431 = vunpack.c.l.b16 %v2299
    %v2432 = vunpack.c.l.b16 %v2300
    %v2433 = vunpack.c.l.b16 %v2301
    %v2434 = vunpack.c.l.b16 %v2302
    %v2435 = vunpack.c.l.b16 %v2303
    %v2436 = vunpack.c.l.b16 %v2304
    %v2437 = vunpack.c.l.b16 %v2305
    %v2438 = vunpack.c.l.b16 %v2306
    %v2439 = vunpack.c.l.b16 %v2307
    %v2440 = vunpack.c.l.b16 %v2308
    %v2441 = vunpack.c.l.b16 %v2309
    %v2442 = vunpack.c.l.b16 %v2310
    %v2443 = vunpack.c.l.b16 %v2311
    %v2444 = vunpack.c.l.b16 %v2312
    %v2445 = vunpack.c.l.b16 %v2313
    %v2446 = vunpack.c.l.b16 %v2314
    %v2447 = vunpack.c.l.b16 %v2315
    %v2448 = vunpack.c.l.b16 %v2316
    %v2449 = vunpack.c.l.b16 %v2317
    %v2450 = vunpack.c.l.b16 %v2318
    %v2451 = vunpack.c.l.b16 %v2319
    %v2452 = vunpack.c.l.b16 %v2320
    %v2453 = vunpack.c.l.b16 %v2321
    %v2454 = vunpack.c.l.b16 %v2322
    %v2455 = vunpack.c.l.b16 %v2323
    %v2456 = vunpack.c.l.b16 %v2324
    %v2457 = vunpack.c.l.b16 %v2325
    %v2458 = vunpack.c.l.b16 %v2326
    %v2459 = vunpack.c.l.b16 %v2327
    %v2460 = vunpack.c.l.b16 %v2328
    %v2461 = vunpack.c.l.b16 %v2329
    %v2462 = vunpack.c.l.b16 %v2330
    %v2463 = vunpack.c.l.b16 %v2331
    %v2464 = vunpack.c.l.b16 %v2332
    %v2465 = vunpack.c.l.b16 %v2333
    %v2466 = vunpack.c.l.b16 %v2334
    %v2467 = vunpack.c.l.b16 %v2335
    %v2468 = vunpack.c.l.b16 %v2336
    %v2469 = vunpack.c.l.b16 %v2337
    %v2470 = vunpack.c.l.b16 %v2338
    %v2471 = vunpack.c.l.b16 %v2339
    %v2472 = vunpack.c.l.b16 %v2340
    %v2473 = vunpack.c.l.b16 %v2341
    %v2474 = vunpack.c.l.b16 %v2342
    %v2475 = vunpack.c.l.b16 %v2343
    %v2476 = vunpack.c.l.b16 %v2344
    %v2477 = vunpack.c.l.b16 %v2345
    %v2478 = vunpack.c.l.b16 %v2346
    %v2479 = vunpack.c.l.b16 %v2347
    %v2480 = vunpack.c.l.b16 %v2348
    %v2481 = vunpack.c.l.b16 %v2349
    %v2482 = vunpack.c.l.b16 %v2350
    %v2483 = vunpack.c.l.b16 %v2351
    %v2484 = vpack.c.b16 %v2421, %v2420
    %v2485 = vpack.c.b16 %v2423, %v2422
    %v2486 = vpack.c.b16 %v2425, %v2424
    %v2487 = vpack.c.b16 %v2427, %v2426
    %v2488 = vpack.c.b16 %v2429, %v2428
    %v2489 = vpack.c.b16 %v2431, %v2430
    %v2490 = vpack.c.b16 %v2433, %v2432
    %v2491 = vpack.c.b16 %v2435, %v2434
    %v2492 = vpack.c.b16 %v2437, %v2436
    %v2493 = vpack.c.b16 %v2439, %v2438
    %v2494 = vpack.c.b16 %v2441, %v2440
    %v2495 = vpack.c.b16 %v2443, %v2442
    %v2496 = vpack.c.b16 %v2445, %v2444
    %v2497 = vpack.c.b16 %v2447, %v2446
    %v2498 = vpack.c.b16 %v2449, %v2448
    %v2499 = vpack.c.b16 %v2451, %v2450
    %v2500 = vpack.c.b16 %v2453, %v2452
    %v2501 = vpack.c.b16 %v2455, %v2454
    %v2502 = vpack.c.b16 %v2457, %v2456
    %v2503 = vpack.c.b16 %v2459, %v2458
    %v2504 = vpack.c.b16 %v2461, %v2460
    %v2505 = vpack.c.b16 %v2463, %v2462
    %v2506 = vpack.c.b16 %v2465, %v2464
    %v2507 = vpack.c.b16 %v2467, %v2466
    %v2508 = vpack.c.b16 %v2469, %v2468
    %v2509 = vpack.c.b16 %v2471, %v2470
    %v2510 = vpack.c.b16 %v2473, %v2472
    %v2511 = vpack.c.b16 %v2475, %v2474
    %v2512 = vpack.c.b16 %v2477, %v2476
    %v2513 = vpack.c.b16 %v2479, %v2478
    %v2514 = vpack.c.b16 %v2481, %v2480
    %v2515 = vpack.c.b16 %v2483, %v2482
    %2548 = vmatpush.bf16.msra.mxu0 %v2491
    %2549 = vmatpush.bf16.msra.mxu0 %v2490
    %2550 = vmatpush.bf16.msra.mxu0 %v2489
    %2551 = vmatpush.bf16.msra.mxu0 %v2488
    %2552 = vmatpush.bf16.msra.mxu0 %v2487
    %2553 = vmatpush.bf16.msra.mxu0 %v2486
    %2554 = vmatpush.bf16.msra.mxu0 %v2485
    %2555 = vmatpush.bf16.msra.mxu0 %v2484
    %2556 = vmatmul.bf16.gmra.mxu0 %v2284
    %v2557 = vpop.f32.mrf.mxu0
    %v2558 = vadd.f32 %v2354, %v2557
    %v2559 = vpop.f32.mrf.mxu0
    %v2560 = vadd.f32 %v2354, %v2559
    %2561 = vdwg.mxu0
    %2562 = vmatpush.bf16.msra.mxu0 %v2499
    %2563 = vmatpush.bf16.msra.mxu0 %v2498
    %2564 = vmatpush.bf16.msra.mxu0 %v2497
    %2565 = vmatpush.bf16.msra.mxu0 %v2496
    %2566 = vmatpush.bf16.msra.mxu0 %v2495
    %2567 = vmatpush.bf16.msra.mxu0 %v2494
    %2568 = vmatpush.bf16.msra.mxu0 %v2493
    %2569 = vmatpush.bf16.msra.mxu0 %v2492
    %2570 = vmatmul.bf16.gmra.mxu0 %v2285
    %v2571 = vpop.f32.mrf.mxu0
    %v2572 = vadd.f32 %v2558, %v2571
    %v2573 = vpop.f32.mrf.mxu0
    %v2574 = vadd.f32 %v2560, %v2573
    %2575 = vdwg.mxu0
    %2576 = vmatpush.bf16.msra.mxu0 %v2507
    %2577 = vmatpush.bf16.msra.mxu0 %v2506
    %2578 = vmatpush.bf16.msra.mxu0 %v2505
    %2579 = vmatpush.bf16.msra.mxu0 %v2504
    %2580 = vmatpush.bf16.msra.mxu0 %v2503
    %2581 = vmatpush.bf16.msra.mxu0 %v2502
    %2582 = vmatpush.bf16.msra.mxu0 %v2501
    %2583 = vmatpush.bf16.msra.mxu0 %v2500
    %2584 = vmatmul.bf16.gmra.mxu0 %v2286
    %v2585 = vpop.f32.mrf.mxu0
    %v2586 = vadd.f32 %v2572, %v2585
    %v2587 = vpop.f32.mrf.mxu0
    %v2588 = vadd.f32 %v2574, %v2587
    %2589 = vdwg.mxu0
    %2590 = vmatpush.bf16.msra.mxu0 %v2515
    %2591 = vmatpush.bf16.msra.mxu0 %v2514
    %2592 = vmatpush.bf16.msra.mxu0 %v2513
    %2593 = vmatpush.bf16.msra.mxu0 %v2512
    %2594 = vmatpush.bf16.msra.mxu0 %v2511
    %2595 = vmatpush.bf16.msra.mxu0 %v2510
    %2596 = vmatpush.bf16.msra.mxu0 %v2509
    %2597 = vmatpush.bf16.msra.mxu0 %v2508
    %2598 = vmatmul.bf16.gmra.mxu0 %v2287
    %v2599 = vpop.f32.mrf.mxu0
    %v2600 = vadd.f32 %v2586, %v2599
    %v2601 = vpop.f32.mrf.mxu0
    %v2602 = vadd.f32 %v2588, %v2601
    %2603 = vdwg.mxu0
    %v2604 = vmax.f32 %v2600, 0.0
    %v2605 = vmax.f32 %v2602, 0.0
    %v2606 = vpack.c.bf16 %v2605, %v2604
    %v2607 = vld [vmem:[%s9] sm:$0xf]
    %v2608 = vld [vmem:[%s9 + $0x4] sm:$0xf]
    %v2609 = vld [vmem:[%s9 + $0x8] sm:$0xf]
    %v2610 = vld [vmem:[%s9 + $0xc] sm:$0xf]
    %v2611 = vld [vmem:[%s9 + $0x10] sm:$0xf]
    %v2612 = vld [vmem:[%s9 + $0x14] sm:$0xf]
    %v2613 = vld [vmem:[%s9 + $0x18] sm:$0xf]
    %v2614 = vld [vmem:[%s9 + $0x1c] sm:$0xf]
    %v2615 = vld [vmem:[%s9 + $0x20] sm:$0xf]
    %v2616 = vld [vmem:[%s9 + $0x24] sm:$0xf]
    %v2617 = vld [vmem:[%s9 + $0x28] sm:$0xf]
    %v2618 = vld [vmem:[%s9 + $0x2c] sm:$0xf]
    %v2619 = vld [vmem:[%s9 + $0x30] sm:$0xf]
    %v2620 = vld [vmem:[%s9 + $0x34] sm:$0xf]
    %v2621 = vld [vmem:[%s9 + $0x38] sm:$0xf]
    %v2622 = vld [vmem:[%s9 + $0x3c] sm:$0xf]
    %v2623 = vld [vmem:[%s10] sm:$0x1]
    %v2625 = vperm.slane %v2623, 0
    %v2643 = vunpack.c.l.b16 %v2607
    %v2644 = vunpack.c.l.b16 %v2608
    %v2645 = vunpack.c.l.b16 %v2609
    %v2646 = vunpack.c.l.b16 %v2610
    %v2647 = vunpack.c.l.b16 %v2611
    %v2648 = vunpack.c.l.b16 %v2612
    %v2649 = vunpack.c.l.b16 %v2613
    %v2650 = vunpack.c.l.b16 %v2614
    %v2651 = vunpack.c.l.b16 %v2615
    %v2652 = vunpack.c.l.b16 %v2616
    %v2653 = vunpack.c.l.b16 %v2617
    %v2654 = vunpack.c.l.b16 %v2618
    %v2655 = vunpack.c.l.b16 %v2619
    %v2656 = vunpack.c.l.b16 %v2620
    %v2657 = vunpack.c.l.b16 %v2621
    %v2658 = vunpack.c.l.b16 %v2622
    %v2659 = vpack.c.b16 %v2644, %v2643
    %v2660 = vpack.c.b16 %v2646, %v2645
    %v2661 = vpack.c.b16 %v2648, %v2647
    %v2662 = vpack.c.b16 %v2650, %v2649
    %v2663 = vpack.c.b16 %v2652, %v2651
    %v2664 = vpack.c.b16 %v2654, %v2653
    %v2665 = vpack.c.b16 %v2656, %v2655
    %v2666 = vpack.c.b16 %v2658, %v2657
    %2675 = vmatpush.bf16.msra.mxu0 %v2666
    %2676 = vmatpush.bf16.msra.mxu0 %v2665
    %2677 = vmatpush.bf16.msra.mxu0 %v2664
    %2678 = vmatpush.bf16.msra.mxu0 %v2663
    %2679 = vmatpush.bf16.msra.mxu0 %v2662
    %2680 = vmatpush.bf16.msra.mxu0 %v2661
    %2681 = vmatpush.bf16.msra.mxu0 %v2660
    %2682 = vmatpush.bf16.msra.mxu0 %v2659
    %2683 = vmatmul.bf16.gmra.mxu0 %v2606
    %v2684 = vpop.f32.mrf.mxu0
    %v2685 = vadd.f32 %v2625, %v2684
    %v2686 = vpop.f32.mrf.mxu0
    %v2687 = vadd.f32 %v2625, %v2686
    %2688 = vdwg.mxu0
    %v2689 = vmax.f32 %v2685, 0.0
    %v2690 = vmax.f32 %v2687, 0.0
    %v2691 = vld [vmem:[%s11] sm:$0x1]
    %v2693 = vperm.slane %v2691, 0
    %v2695 = vmul.f32 %v2689, %v2693
    %v2696 = vmul.f32 %v2690, %v2693
    %vm2697 = vcmask 261120
    %v2698 = vsel %vm2697, %v2695, 0.0
    %2699 = vadd.xlane.f32.xlu0 %v2698
    %v2700 = vpop.xlane.xlu0 %2699
    %v2701 = vsel %vm2697, %v2696, 0.0
    %2702 = vadd.xlane.f32.xlu0 %v2701
    %v2703 = vpop.xlane.xlu0 %2702
    %v2704 = vld [vmem:[#allocation3] sm:$0x1]
    %v2706 = vperm.slane %v2704, 0
    %v2708 = vadd.f32 %v2700, %v2706
    %v2709 = vadd.f32 %v2703, %v2706
    %vm2710 = vcmask 7168
    %2711 = vst.msk [vmem:[%s13] sm:$0xff] %vm2710, %v2708
    %2712 = vst.msk [vmem:[%s13 + $0x8] sm:$0xff] %vm2710, %v2709
    // Predicated region
    $region66: #{tpu_custom_call.1} parent=1 // pred_check
      _
    $region67: #{tpu_custom_call.1} parent=1 // pred_check_branch
      %2714 = sbr.rel (0) target = $region69
    $region68: #{tpu_custom_call.1} parent=1 // pred_region
      _
    $region69: #{tpu_custom_call.1} parent=1 // pred_fallthru
      _
    // Predicated region
    $region70: #{tpu_custom_call.1} parent=1 // pred_check
      _
    $region71: #{tpu_custom_call.1} parent=1 // pred_check_branch
      %2716 = sbr.rel (0) target = $region73
    $region72: #{tpu_custom_call.1} parent=1 // pred_region
      _
    $region73: #{tpu_custom_call.1} parent=1 // pred_fallthru
      _
    %2717 = vsyncpa [#allocation5], 1
    %2718 = vsyncpa [#allocation7], 1

</llo_original>
